<compile_context>
chip_gen: v7x
topology: tpu7x:2x2x1
jax: 0.10.0
libtpu: 0.0.40
codegen_flags: <defaults>
</compile_context>

<pallas_src>
import functools

import jax
import jax.numpy as jnp
from jax.experimental import pallas as pl
from jax.experimental.pallas import tpu as pltpu


def attention_kernel(x_ref, wqkv_ref, wout_ref, bout_ref, o_ref, *,
                     num_heads, batch, scale):
    H = num_heads
    B = batch
    T, D = x_ref.shape            # T = B * N tokens
    E = D // H
    N = T // B

    x = x_ref[...]                                                     # (T, D)

    # (1) Fused QKV projection: one lane-dense MXU pass.
    qkv = jnp.dot(x, wqkv_ref[...], preferred_element_type=jnp.float32)  # (T, 3D)

    # Lane slices.  Column layout inside each D slab is h*E + e, exactly PyTorch's
    # Rearrange('b n (num_qkv heads e) -> ...') ordering.
    q = qkv[:, :D] * scale
    k = qkv[:, D:2 * D]
    v = qkv[:, 2 * D:]

    # (B, N, D) views: splits the token (sublane) axis at the 8-row tile boundary.
    q3 = q.reshape(B, N, D)
    k3 = k.reshape(B, N, D)
    v3 = v.reshape(B, N, D)

    # Masks for the within-head (E contiguous lanes) butterfly sum, built once.
    lane = jax.lax.broadcasted_iota(jnp.int32, (B, N, D), 2)
    e_pos = lane % E
    dists = []
    d_ = E // 2
    while d_ >= 1:
        dists.append(d_)
        d_ //= 2
    masks = [(e_pos % (2 * d_)) < d_ for d_ in dists]   # partner at +d_ where True

    out_acc = jnp.zeros((B, N, D), jnp.float32)

    # (2) Attention core on the VPU, unrolled over the key/value position m.
    # nn.Softmax(dim=1) is a softmax across HEADS for each fixed (b, n, m), so every
    # m-step contains its full normalization group and fuses logits+softmax+attn@v.
    for m in range(N):
        # Per-head dot products: k row m broadcast over n (sublane broadcast).
        prod = q3 * k3[:, m:m + 1, :]                                  # (B, N, D)

        # Segmented sum over the head's E lanes, result replicated on those lanes.
        s = prod
        for d_, lo in zip(dists, masks):
            s = s + jnp.where(lo,
                              jnp.roll(s, -d_, axis=-1),
                              jnp.roll(s, d_, axis=-1))
        logits = s                      # logits[b,h,n,m] replicated over the E lanes

        # Softmax over heads: each head value appears E times along the lane axis, so
        # the full-lane max IS the head max and the full-lane sum is E * the head sum.
        z = logits - jnp.max(logits, axis=-1, keepdims=True)
        p = jnp.exp(z)
        denom = jnp.sum(p, axis=-1, keepdims=True) * (1.0 / E)
        attn = p / denom                # exact divide (tighter numerics, EUP not binding)

        # attn @ v contribution for this m: v row m broadcast over n; the attention
        # weight already sits on its head's lanes -> pure elementwise multiply-add.
        out_acc = out_acc + attn * v3[:, m:m + 1, :]

    # (3) Output projection: 'b h n e -> b n (h e)' is already the lane layout of
    # out_acc, so a single lane-dense (T,D) @ (D,D) MXU pass + bias finishes it.
    out_flat = out_acc.reshape(T, D)
    y = jnp.dot(out_flat, wout_ref[...],
                preferred_element_type=jnp.float32) + bout_ref[...]
    o_ref[...] = y.astype(o_ref.dtype)


def attention_pallas(x, w_qkv, w_out, b_out, num_heads):
    B, N, D = x.shape
    H = num_heads
    assert D % H == 0
    E = D // H
    assert (E & (E - 1)) == 0, "head dim must be a power of two for the butterfly sum"
    T = B * N
    scale = E ** (-0.5)

    # One-time wrapper-side layout prep: 2-D lane-dense weights (contiguous DMA, no
    # padded (.,.,4) slabs in VMEM).
    w_qkv_t = w_qkv.T                 # (D, 3D); columns follow (qkv, head, e) order
    w_out_t = w_out.T                 # (D, D)
    b_out2 = b_out.reshape(1, D)
    x2 = x.reshape(T, D)              # fuse batch into tokens

    kernel = functools.partial(attention_kernel, num_heads=H, batch=B, scale=scale)
    y2 = pl.pallas_call(
        kernel,
        out_shape=jax.ShapeDtypeStruct((T, D), x.dtype),
        grid_spec=pltpu.PrefetchScalarGridSpec(
            num_scalar_prefetch=0,
            grid=(1,),   # single instance; everything fits trivially in VMEM
            in_specs=[
                pl.BlockSpec((T, D), lambda i: (0, 0)),          # tokens
                pl.BlockSpec((D, 3 * D), lambda i: (0, 0)),      # qkv weight (2-D)
                pl.BlockSpec((D, D), lambda i: (0, 0)),          # out weight (2-D)
                pl.BlockSpec((1, D), lambda i: (0, 0)),          # out bias
            ],
            out_specs=pl.BlockSpec((T, D), lambda i: (0, 0)),
        ),
        compiler_params=pltpu.CompilerParams(dimension_semantics=("arbitrary",)),
    )(x2, w_qkv_t, w_out_t, b_out2)
    return y2.reshape(B, N, D)


def attention_ref(x, w_qkv, w_out, b_out, num_heads):
    # Pure-JAX reference reproducing the PyTorch forward exactly.
    B, N, D = x.shape
    E = D // num_heads
    scale = E ** (-0.5)
    qkv = x @ w_qkv.T                                                  # (B, N, 3D)
    qkv = qkv.reshape(B, N, 3, num_heads, E).transpose(0, 2, 3, 1, 4)  # (B,3,H,N,E)
    q, k, v = qkv[:, 0], qkv[:, 1], qkv[:, 2]
    logits = jnp.einsum('bhne,bhme->bhnm', q, k) * scale
    attn = jax.nn.softmax(logits, axis=1)                              # softmax over heads!
    out = jnp.einsum('bhnm,bhme->bhne', attn, v)
    out = out.transpose(0, 2, 1, 3).reshape(B, N, D)
    return out @ w_out.T + b_out


if __name__ == "__main__":
    B, N, D, H = 2, 8, 32, 8   # small shapes: batch=2, seq=8, hidden=32, heads=8

    key = jax.random.PRNGKey(0)
    k1, k2, k3, k4 = jax.random.split(key, 4)
    x = jax.random.normal(k1, (B, N, D), dtype=jnp.float32)
    w_qkv = jax.random.normal(k2, (3 * D, D), dtype=jnp.float32) / jnp.sqrt(D)
    w_out = jax.random.normal(k3, (D, D), dtype=jnp.float32) / jnp.sqrt(D)
    b_out = jax.random.normal(k4, (D,), dtype=jnp.float32) * 0.01

    y = attention_pallas(x, w_qkv, w_out, b_out, H)
    jax.block_until_ready(y)

    y_ref = attention_ref(x, w_qkv, w_out, b_out, H)
    assert y.shape == (B, N, D)
    max_err = jnp.max(jnp.abs(y - y_ref))
    # tolerance covers MXU f32 matmul precision differences vs the XLA reference
    assert jnp.allclose(y, y_ref, atol=2e-3, rtol=2e-3), f"mismatch vs reference: {max_err}"

    print("KERNEL_OK")
</pallas_src>

<mosaic_0001>
module attributes {stable_mosaic.version = 11 : i64} {
  func.func @attention_kernel(%arg0: i32, %arg1: memref<16x32xf32, #tpu.memory_space<vmem>>, %arg2: memref<32x96xf32, #tpu.memory_space<vmem>>, %arg3: memref<32x32xf32, #tpu.memory_space<vmem>>, %arg4: memref<1x32xf32, #tpu.memory_space<vmem>>, %arg5: memref<16x32xf32, #tpu.memory_space<vmem>>) attributes {dimension_semantics = [#tpu.dimension_semantics<arbitrary>], iteration_bounds = array<i64: 1>, scalar_prefetch = 0 : i64, scratch_operands = 0 : i64, tpu.core_type = #tpu.core_type<tc>, window_params = [{pipeline_mode = #tpu.pipeline_mode<synchronous>, transform_indices = @transform_0, window_bounds = array<i64: 16, 32>}, {pipeline_mode = #tpu.pipeline_mode<synchronous>, transform_indices = @transform_1, window_bounds = array<i64: 32, 96>}, {pipeline_mode = #tpu.pipeline_mode<synchronous>, transform_indices = @transform_2, window_bounds = array<i64: 32, 32>}, {pipeline_mode = #tpu.pipeline_mode<synchronous>, transform_indices = @transform_3, window_bounds = array<i64: 1, 32>}, {pipeline_mode = #tpu.pipeline_mode<synchronous>, transform_indices = @transform_4, window_bounds = array<i64: 16, 32>}]} {
    %c0 = arith.constant 0 : index
    %c0_0 = arith.constant 0 : index
    %0 = vector.load %arg1[%c0, %c0_0] : memref<16x32xf32, #tpu.memory_space<vmem>>, vector<16x32xf32>
    %c0_1 = arith.constant 0 : index
    %c0_2 = arith.constant 0 : index
    %1 = vector.load %arg2[%c0_1, %c0_2] : memref<32x96xf32, #tpu.memory_space<vmem>>, vector<32x96xf32>
    %cst = arith.constant dense<0.000000e+00> : vector<16x96xf32>
    %2 = tpu.matmul %0, %1, %cst {dimension_numbers = #tpu.dot_dimension_numbers<[1], [0], [0], [1], [0, 0, 1, 1], [], []>} : vector<16x32xf32>, vector<32x96xf32>, vector<16x96xf32> -> vector<16x96xf32>
    %3 = vector.extract_strided_slice %2 {offsets = [0, 0], sizes = [16, 32], strides = [1, 1]} : vector<16x96xf32> to vector<16x32xf32>
    %cst_3 = arith.constant 5.000000e-01 : f32
    %4 = vector.broadcast %cst_3 : f32 to vector<16x32xf32>
    %5 = arith.mulf %3, %4 : vector<16x32xf32>
    %6 = vector.extract_strided_slice %2 {offsets = [0, 32], sizes = [16, 32], strides = [1, 1]} : vector<16x96xf32> to vector<16x32xf32>
    %7 = vector.extract_strided_slice %2 {offsets = [0, 64], sizes = [16, 32], strides = [1, 1]} : vector<16x96xf32> to vector<16x32xf32>
    %8 = vector.shape_cast %5 : vector<16x32xf32> to vector<2x8x32xf32>
    %9 = vector.shape_cast %6 : vector<16x32xf32> to vector<2x8x32xf32>
    %10 = vector.shape_cast %7 : vector<16x32xf32> to vector<2x8x32xf32>
    %11 = tpu.iota {dimensions = array<i32: 2>} : vector<2x8x32xi32>
    %c4_i32 = arith.constant 4 : i32
    %c0_i32 = arith.constant 0 : i32
    %12 = arith.cmpi eq, %c4_i32, %c0_i32 : i32
    %c1_i32 = arith.constant 1 : i32
    %13 = arith.select %12, %c1_i32, %c4_i32 : i32
    %14 = vector.broadcast %13 : i32 to vector<2x8x32xi32>
    %15 = arith.remsi %11, %14 : vector<2x8x32xi32>
    %c0_i32_4 = arith.constant 0 : i32
    %16 = vector.broadcast %c0_i32_4 : i32 to vector<2x8x32xi32>
    %17 = arith.cmpi ne, %15, %16 : vector<2x8x32xi32>
    %c0_i32_5 = arith.constant 0 : i32
    %18 = vector.broadcast %c0_i32_5 : i32 to vector<2x8x32xi32>
    %19 = arith.cmpi slt, %15, %18 : vector<2x8x32xi32>
    %c0_i32_6 = arith.constant 0 : i32
    %20 = arith.cmpi slt, %13, %c0_i32_6 : i32
    %21 = vector.broadcast %20 : i1 to vector<2x8x32xi1>
    %22 = vector.broadcast %21 : vector<2x8x32xi1> to vector<2x8x32xi1>
    %23 = arith.xori %19, %22 : vector<2x8x32xi1>
    %24 = arith.andi %23, %17 : vector<2x8x32xi1>
    %25 = vector.broadcast %13 : i32 to vector<2x8x32xi32>
    %26 = arith.addi %15, %25 : vector<2x8x32xi32>
    %27 = arith.select %24, %26, %15 : vector<2x8x32xi1>, vector<2x8x32xi32>
    %c4_i32_7 = arith.constant 4 : i32
    %c0_i32_8 = arith.constant 0 : i32
    %28 = arith.cmpi eq, %c4_i32_7, %c0_i32_8 : i32
    %c1_i32_9 = arith.constant 1 : i32
    %29 = arith.select %28, %c1_i32_9, %c4_i32_7 : i32
    %30 = vector.broadcast %29 : i32 to vector<2x8x32xi32>
    %31 = arith.remsi %27, %30 : vector<2x8x32xi32>
    %c0_i32_10 = arith.constant 0 : i32
    %32 = vector.broadcast %c0_i32_10 : i32 to vector<2x8x32xi32>
    %33 = arith.cmpi ne, %31, %32 : vector<2x8x32xi32>
    %c0_i32_11 = arith.constant 0 : i32
    %34 = vector.broadcast %c0_i32_11 : i32 to vector<2x8x32xi32>
    %35 = arith.cmpi slt, %31, %34 : vector<2x8x32xi32>
    %c0_i32_12 = arith.constant 0 : i32
    %36 = arith.cmpi slt, %29, %c0_i32_12 : i32
    %37 = vector.broadcast %36 : i1 to vector<2x8x32xi1>
    %38 = vector.broadcast %37 : vector<2x8x32xi1> to vector<2x8x32xi1>
    %39 = arith.xori %35, %38 : vector<2x8x32xi1>
    %40 = arith.andi %39, %33 : vector<2x8x32xi1>
    %41 = vector.broadcast %29 : i32 to vector<2x8x32xi32>
    %42 = arith.addi %31, %41 : vector<2x8x32xi32>
    %43 = arith.select %40, %42, %31 : vector<2x8x32xi1>, vector<2x8x32xi32>
    %c2_i32 = arith.constant 2 : i32
    %44 = vector.broadcast %c2_i32 : i32 to vector<2x8x32xi32>
    %45 = arith.cmpi slt, %43, %44 : vector<2x8x32xi32>
    %c2_i32_13 = arith.constant 2 : i32
    %c0_i32_14 = arith.constant 0 : i32
    %46 = arith.cmpi eq, %c2_i32_13, %c0_i32_14 : i32
    %c1_i32_15 = arith.constant 1 : i32
    %47 = arith.select %46, %c1_i32_15, %c2_i32_13 : i32
    %48 = vector.broadcast %47 : i32 to vector<2x8x32xi32>
    %49 = arith.remsi %27, %48 : vector<2x8x32xi32>
    %c0_i32_16 = arith.constant 0 : i32
    %50 = vector.broadcast %c0_i32_16 : i32 to vector<2x8x32xi32>
    %51 = arith.cmpi ne, %49, %50 : vector<2x8x32xi32>
    %c0_i32_17 = arith.constant 0 : i32
    %52 = vector.broadcast %c0_i32_17 : i32 to vector<2x8x32xi32>
    %53 = arith.cmpi slt, %49, %52 : vector<2x8x32xi32>
    %c0_i32_18 = arith.constant 0 : i32
    %54 = arith.cmpi slt, %47, %c0_i32_18 : i32
    %55 = vector.broadcast %54 : i1 to vector<2x8x32xi1>
    %56 = vector.broadcast %55 : vector<2x8x32xi1> to vector<2x8x32xi1>
    %57 = arith.xori %53, %56 : vector<2x8x32xi1>
    %58 = arith.andi %57, %51 : vector<2x8x32xi1>
    %59 = vector.broadcast %47 : i32 to vector<2x8x32xi32>
    %60 = arith.addi %49, %59 : vector<2x8x32xi32>
    %61 = arith.select %58, %60, %49 : vector<2x8x32xi1>, vector<2x8x32xi32>
    %c1_i32_19 = arith.constant 1 : i32
    %62 = vector.broadcast %c1_i32_19 : i32 to vector<2x8x32xi32>
    %63 = arith.cmpi slt, %61, %62 : vector<2x8x32xi32>
    %cst_20 = arith.constant 0.000000e+00 : f32
    %64 = vector.broadcast %cst_20 : f32 to vector<2x8x32xf32>
    %65 = vector.extract_strided_slice %9 {offsets = [0, 0, 0], sizes = [2, 1, 32], strides = [1, 1, 1]} : vector<2x8x32xf32> to vector<2x1x32xf32>
    %66 = vector.broadcast %65 : vector<2x1x32xf32> to vector<2x8x32xf32>
    %67 = arith.mulf %8, %66 : vector<2x8x32xf32>
    %68 = vector.extract_strided_slice %67 {offsets = [0, 0, 2], sizes = [2, 8, 30], strides = [1, 1, 1]} : vector<2x8x32xf32> to vector<2x8x30xf32>
    %69 = vector.extract_strided_slice %67 {offsets = [0, 0, 0], sizes = [2, 8, 2], strides = [1, 1, 1]} : vector<2x8x32xf32> to vector<2x8x2xf32>
    %70 = tpu.concatenate %68, %69 in 2 : vector<2x8x30xf32>, vector<2x8x2xf32> -> vector<2x8x32xf32>
    %71 = vector.extract_strided_slice %67 {offsets = [0, 0, 30], sizes = [2, 8, 2], strides = [1, 1, 1]} : vector<2x8x32xf32> to vector<2x8x2xf32>
    %72 = vector.extract_strided_slice %67 {offsets = [0, 0, 0], sizes = [2, 8, 30], strides = [1, 1, 1]} : vector<2x8x32xf32> to vector<2x8x30xf32>
    %73 = tpu.concatenate %71, %72 in 2 : vector<2x8x2xf32>, vector<2x8x30xf32> -> vector<2x8x32xf32>
    %74 = arith.select %45, %70, %73 : vector<2x8x32xi1>, vector<2x8x32xf32>
    %75 = arith.addf %67, %74 : vector<2x8x32xf32>
    %76 = vector.extract_strided_slice %75 {offsets = [0, 0, 1], sizes = [2, 8, 31], strides = [1, 1, 1]} : vector<2x8x32xf32> to vector<2x8x31xf32>
    %77 = vector.extract_strided_slice %75 {offsets = [0, 0, 0], sizes = [2, 8, 1], strides = [1, 1, 1]} : vector<2x8x32xf32> to vector<2x8x1xf32>
    %78 = tpu.concatenate %76, %77 in 2 : vector<2x8x31xf32>, vector<2x8x1xf32> -> vector<2x8x32xf32>
    %79 = vector.extract_strided_slice %75 {offsets = [0, 0, 31], sizes = [2, 8, 1], strides = [1, 1, 1]} : vector<2x8x32xf32> to vector<2x8x1xf32>
    %80 = vector.extract_strided_slice %75 {offsets = [0, 0, 0], sizes = [2, 8, 31], strides = [1, 1, 1]} : vector<2x8x32xf32> to vector<2x8x31xf32>
    %81 = tpu.concatenate %79, %80 in 2 : vector<2x8x1xf32>, vector<2x8x31xf32> -> vector<2x8x32xf32>
    %82 = arith.select %63, %78, %81 : vector<2x8x32xi1>, vector<2x8x32xf32>
    %83 = arith.addf %75, %82 : vector<2x8x32xf32>
    %cst_21 = arith.constant dense<0xFF800000> : vector<2x8xf32>
    %84 = vector.multi_reduction <maximumf>, %83, %cst_21 [2] : vector<2x8x32xf32> to vector<2x8xf32>
    %85 = vector.shape_cast %84 : vector<2x8xf32> to vector<2x8x1xf32>
    %86 = vector.broadcast %85 : vector<2x8x1xf32> to vector<2x8x32xf32>
    %87 = arith.subf %83, %86 : vector<2x8x32xf32>
    %88 = math.exp %87 : vector<2x8x32xf32>
    %cst_22 = arith.constant dense<0.000000e+00> : vector<2x8xf32>
    %89 = vector.multi_reduction <add>, %88, %cst_22 [2] : vector<2x8x32xf32> to vector<2x8xf32>
    %90 = vector.shape_cast %89 : vector<2x8xf32> to vector<2x8x1xf32>
    %cst_23 = arith.constant 2.500000e-01 : f32
    %91 = vector.broadcast %cst_23 : f32 to vector<2x8x1xf32>
    %92 = arith.mulf %90, %91 : vector<2x8x1xf32>
    %93 = vector.broadcast %92 : vector<2x8x1xf32> to vector<2x8x32xf32>
    %94 = arith.divf %88, %93 : vector<2x8x32xf32>
    %95 = vector.extract_strided_slice %10 {offsets = [0, 0, 0], sizes = [2, 1, 32], strides = [1, 1, 1]} : vector<2x8x32xf32> to vector<2x1x32xf32>
    %96 = vector.broadcast %95 : vector<2x1x32xf32> to vector<2x8x32xf32>
    %97 = arith.mulf %94, %96 : vector<2x8x32xf32>
    %98 = arith.addf %64, %97 : vector<2x8x32xf32>
    %99 = vector.extract_strided_slice %9 {offsets = [0, 1, 0], sizes = [2, 1, 32], strides = [1, 1, 1]} : vector<2x8x32xf32> to vector<2x1x32xf32>
    %100 = vector.broadcast %99 : vector<2x1x32xf32> to vector<2x8x32xf32>
    %101 = arith.mulf %8, %100 : vector<2x8x32xf32>
    %102 = vector.extract_strided_slice %101 {offsets = [0, 0, 2], sizes = [2, 8, 30], strides = [1, 1, 1]} : vector<2x8x32xf32> to vector<2x8x30xf32>
    %103 = vector.extract_strided_slice %101 {offsets = [0, 0, 0], sizes = [2, 8, 2], strides = [1, 1, 1]} : vector<2x8x32xf32> to vector<2x8x2xf32>
    %104 = tpu.concatenate %102, %103 in 2 : vector<2x8x30xf32>, vector<2x8x2xf32> -> vector<2x8x32xf32>
    %105 = vector.extract_strided_slice %101 {offsets = [0, 0, 30], sizes = [2, 8, 2], strides = [1, 1, 1]} : vector<2x8x32xf32> to vector<2x8x2xf32>
    %106 = vector.extract_strided_slice %101 {offsets = [0, 0, 0], sizes = [2, 8, 30], strides = [1, 1, 1]} : vector<2x8x32xf32> to vector<2x8x30xf32>
    %107 = tpu.concatenate %105, %106 in 2 : vector<2x8x2xf32>, vector<2x8x30xf32> -> vector<2x8x32xf32>
    %108 = arith.select %45, %104, %107 : vector<2x8x32xi1>, vector<2x8x32xf32>
    %109 = arith.addf %101, %108 : vector<2x8x32xf32>
    %110 = vector.extract_strided_slice %109 {offsets = [0, 0, 1], sizes = [2, 8, 31], strides = [1, 1, 1]} : vector<2x8x32xf32> to vector<2x8x31xf32>
    %111 = vector.extract_strided_slice %109 {offsets = [0, 0, 0], sizes = [2, 8, 1], strides = [1, 1, 1]} : vector<2x8x32xf32> to vector<2x8x1xf32>
    %112 = tpu.concatenate %110, %111 in 2 : vector<2x8x31xf32>, vector<2x8x1xf32> -> vector<2x8x32xf32>
    %113 = vector.extract_strided_slice %109 {offsets = [0, 0, 31], sizes = [2, 8, 1], strides = [1, 1, 1]} : vector<2x8x32xf32> to vector<2x8x1xf32>
    %114 = vector.extract_strided_slice %109 {offsets = [0, 0, 0], sizes = [2, 8, 31], strides = [1, 1, 1]} : vector<2x8x32xf32> to vector<2x8x31xf32>
    %115 = tpu.concatenate %113, %114 in 2 : vector<2x8x1xf32>, vector<2x8x31xf32> -> vector<2x8x32xf32>
    %116 = arith.select %63, %112, %115 : vector<2x8x32xi1>, vector<2x8x32xf32>
    %117 = arith.addf %109, %116 : vector<2x8x32xf32>
    %cst_24 = arith.constant dense<0xFF800000> : vector<2x8xf32>
    %118 = vector.multi_reduction <maximumf>, %117, %cst_24 [2] : vector<2x8x32xf32> to vector<2x8xf32>
    %119 = vector.shape_cast %118 : vector<2x8xf32> to vector<2x8x1xf32>
    %120 = vector.broadcast %119 : vector<2x8x1xf32> to vector<2x8x32xf32>
    %121 = arith.subf %117, %120 : vector<2x8x32xf32>
    %122 = math.exp %121 : vector<2x8x32xf32>
    %cst_25 = arith.constant dense<0.000000e+00> : vector<2x8xf32>
    %123 = vector.multi_reduction <add>, %122, %cst_25 [2] : vector<2x8x32xf32> to vector<2x8xf32>
    %124 = vector.shape_cast %123 : vector<2x8xf32> to vector<2x8x1xf32>
    %cst_26 = arith.constant 2.500000e-01 : f32
    %125 = vector.broadcast %cst_26 : f32 to vector<2x8x1xf32>
    %126 = arith.mulf %124, %125 : vector<2x8x1xf32>
    %127 = vector.broadcast %126 : vector<2x8x1xf32> to vector<2x8x32xf32>
    %128 = arith.divf %122, %127 : vector<2x8x32xf32>
    %129 = vector.extract_strided_slice %10 {offsets = [0, 1, 0], sizes = [2, 1, 32], strides = [1, 1, 1]} : vector<2x8x32xf32> to vector<2x1x32xf32>
    %130 = vector.broadcast %129 : vector<2x1x32xf32> to vector<2x8x32xf32>
    %131 = arith.mulf %128, %130 : vector<2x8x32xf32>
    %132 = arith.addf %98, %131 : vector<2x8x32xf32>
    %133 = vector.extract_strided_slice %9 {offsets = [0, 2, 0], sizes = [2, 1, 32], strides = [1, 1, 1]} : vector<2x8x32xf32> to vector<2x1x32xf32>
    %134 = vector.broadcast %133 : vector<2x1x32xf32> to vector<2x8x32xf32>
    %135 = arith.mulf %8, %134 : vector<2x8x32xf32>
    %136 = vector.extract_strided_slice %135 {offsets = [0, 0, 2], sizes = [2, 8, 30], strides = [1, 1, 1]} : vector<2x8x32xf32> to vector<2x8x30xf32>
    %137 = vector.extract_strided_slice %135 {offsets = [0, 0, 0], sizes = [2, 8, 2], strides = [1, 1, 1]} : vector<2x8x32xf32> to vector<2x8x2xf32>
    %138 = tpu.concatenate %136, %137 in 2 : vector<2x8x30xf32>, vector<2x8x2xf32> -> vector<2x8x32xf32>
    %139 = vector.extract_strided_slice %135 {offsets = [0, 0, 30], sizes = [2, 8, 2], strides = [1, 1, 1]} : vector<2x8x32xf32> to vector<2x8x2xf32>
    %140 = vector.extract_strided_slice %135 {offsets = [0, 0, 0], sizes = [2, 8, 30], strides = [1, 1, 1]} : vector<2x8x32xf32> to vector<2x8x30xf32>
    %141 = tpu.concatenate %139, %140 in 2 : vector<2x8x2xf32>, vector<2x8x30xf32> -> vector<2x8x32xf32>
    %142 = arith.select %45, %138, %141 : vector<2x8x32xi1>, vector<2x8x32xf32>
    %143 = arith.addf %135, %142 : vector<2x8x32xf32>
    %144 = vector.extract_strided_slice %143 {offsets = [0, 0, 1], sizes = [2, 8, 31], strides = [1, 1, 1]} : vector<2x8x32xf32> to vector<2x8x31xf32>
    %145 = vector.extract_strided_slice %143 {offsets = [0, 0, 0], sizes = [2, 8, 1], strides = [1, 1, 1]} : vector<2x8x32xf32> to vector<2x8x1xf32>
    %146 = tpu.concatenate %144, %145 in 2 : vector<2x8x31xf32>, vector<2x8x1xf32> -> vector<2x8x32xf32>
    %147 = vector.extract_strided_slice %143 {offsets = [0, 0, 31], sizes = [2, 8, 1], strides = [1, 1, 1]} : vector<2x8x32xf32> to vector<2x8x1xf32>
    %148 = vector.extract_strided_slice %143 {offsets = [0, 0, 0], sizes = [2, 8, 31], strides = [1, 1, 1]} : vector<2x8x32xf32> to vector<2x8x31xf32>
    %149 = tpu.concatenate %147, %148 in 2 : vector<2x8x1xf32>, vector<2x8x31xf32> -> vector<2x8x32xf32>
    %150 = arith.select %63, %146, %149 : vector<2x8x32xi1>, vector<2x8x32xf32>
    %151 = arith.addf %143, %150 : vector<2x8x32xf32>
    %cst_27 = arith.constant dense<0xFF800000> : vector<2x8xf32>
    %152 = vector.multi_reduction <maximumf>, %151, %cst_27 [2] : vector<2x8x32xf32> to vector<2x8xf32>
    %153 = vector.shape_cast %152 : vector<2x8xf32> to vector<2x8x1xf32>
    %154 = vector.broadcast %153 : vector<2x8x1xf32> to vector<2x8x32xf32>
    %155 = arith.subf %151, %154 : vector<2x8x32xf32>
    %156 = math.exp %155 : vector<2x8x32xf32>
    %cst_28 = arith.constant dense<0.000000e+00> : vector<2x8xf32>
    %157 = vector.multi_reduction <add>, %156, %cst_28 [2] : vector<2x8x32xf32> to vector<2x8xf32>
    %158 = vector.shape_cast %157 : vector<2x8xf32> to vector<2x8x1xf32>
    %cst_29 = arith.constant 2.500000e-01 : f32
    %159 = vector.broadcast %cst_29 : f32 to vector<2x8x1xf32>
    %160 = arith.mulf %158, %159 : vector<2x8x1xf32>
    %161 = vector.broadcast %160 : vector<2x8x1xf32> to vector<2x8x32xf32>
    %162 = arith.divf %156, %161 : vector<2x8x32xf32>
    %163 = vector.extract_strided_slice %10 {offsets = [0, 2, 0], sizes = [2, 1, 32], strides = [1, 1, 1]} : vector<2x8x32xf32> to vector<2x1x32xf32>
    %164 = vector.broadcast %163 : vector<2x1x32xf32> to vector<2x8x32xf32>
    %165 = arith.mulf %162, %164 : vector<2x8x32xf32>
    %166 = arith.addf %132, %165 : vector<2x8x32xf32>
    %167 = vector.extract_strided_slice %9 {offsets = [0, 3, 0], sizes = [2, 1, 32], strides = [1, 1, 1]} : vector<2x8x32xf32> to vector<2x1x32xf32>
    %168 = vector.broadcast %167 : vector<2x1x32xf32> to vector<2x8x32xf32>
    %169 = arith.mulf %8, %168 : vector<2x8x32xf32>
    %170 = vector.extract_strided_slice %169 {offsets = [0, 0, 2], sizes = [2, 8, 30], strides = [1, 1, 1]} : vector<2x8x32xf32> to vector<2x8x30xf32>
    %171 = vector.extract_strided_slice %169 {offsets = [0, 0, 0], sizes = [2, 8, 2], strides = [1, 1, 1]} : vector<2x8x32xf32> to vector<2x8x2xf32>
    %172 = tpu.concatenate %170, %171 in 2 : vector<2x8x30xf32>, vector<2x8x2xf32> -> vector<2x8x32xf32>
    %173 = vector.extract_strided_slice %169 {offsets = [0, 0, 30], sizes = [2, 8, 2], strides = [1, 1, 1]} : vector<2x8x32xf32> to vector<2x8x2xf32>
    %174 = vector.extract_strided_slice %169 {offsets = [0, 0, 0], sizes = [2, 8, 30], strides = [1, 1, 1]} : vector<2x8x32xf32> to vector<2x8x30xf32>
    %175 = tpu.concatenate %173, %174 in 2 : vector<2x8x2xf32>, vector<2x8x30xf32> -> vector<2x8x32xf32>
    %176 = arith.select %45, %172, %175 : vector<2x8x32xi1>, vector<2x8x32xf32>
    %177 = arith.addf %169, %176 : vector<2x8x32xf32>
    %178 = vector.extract_strided_slice %177 {offsets = [0, 0, 1], sizes = [2, 8, 31], strides = [1, 1, 1]} : vector<2x8x32xf32> to vector<2x8x31xf32>
    %179 = vector.extract_strided_slice %177 {offsets = [0, 0, 0], sizes = [2, 8, 1], strides = [1, 1, 1]} : vector<2x8x32xf32> to vector<2x8x1xf32>
    %180 = tpu.concatenate %178, %179 in 2 : vector<2x8x31xf32>, vector<2x8x1xf32> -> vector<2x8x32xf32>
    %181 = vector.extract_strided_slice %177 {offsets = [0, 0, 31], sizes = [2, 8, 1], strides = [1, 1, 1]} : vector<2x8x32xf32> to vector<2x8x1xf32>
    %182 = vector.extract_strided_slice %177 {offsets = [0, 0, 0], sizes = [2, 8, 31], strides = [1, 1, 1]} : vector<2x8x32xf32> to vector<2x8x31xf32>
    %183 = tpu.concatenate %181, %182 in 2 : vector<2x8x1xf32>, vector<2x8x31xf32> -> vector<2x8x32xf32>
    %184 = arith.select %63, %180, %183 : vector<2x8x32xi1>, vector<2x8x32xf32>
    %185 = arith.addf %177, %184 : vector<2x8x32xf32>
    %cst_30 = arith.constant dense<0xFF800000> : vector<2x8xf32>
    %186 = vector.multi_reduction <maximumf>, %185, %cst_30 [2] : vector<2x8x32xf32> to vector<2x8xf32>
    %187 = vector.shape_cast %186 : vector<2x8xf32> to vector<2x8x1xf32>
    %188 = vector.broadcast %187 : vector<2x8x1xf32> to vector<2x8x32xf32>
    %189 = arith.subf %185, %188 : vector<2x8x32xf32>
    %190 = math.exp %189 : vector<2x8x32xf32>
    %cst_31 = arith.constant dense<0.000000e+00> : vector<2x8xf32>
    %191 = vector.multi_reduction <add>, %190, %cst_31 [2] : vector<2x8x32xf32> to vector<2x8xf32>
    %192 = vector.shape_cast %191 : vector<2x8xf32> to vector<2x8x1xf32>
    %cst_32 = arith.constant 2.500000e-01 : f32
    %193 = vector.broadcast %cst_32 : f32 to vector<2x8x1xf32>
    %194 = arith.mulf %192, %193 : vector<2x8x1xf32>
    %195 = vector.broadcast %194 : vector<2x8x1xf32> to vector<2x8x32xf32>
    %196 = arith.divf %190, %195 : vector<2x8x32xf32>
    %197 = vector.extract_strided_slice %10 {offsets = [0, 3, 0], sizes = [2, 1, 32], strides = [1, 1, 1]} : vector<2x8x32xf32> to vector<2x1x32xf32>
    %198 = vector.broadcast %197 : vector<2x1x32xf32> to vector<2x8x32xf32>
    %199 = arith.mulf %196, %198 : vector<2x8x32xf32>
    %200 = arith.addf %166, %199 : vector<2x8x32xf32>
    %201 = vector.extract_strided_slice %9 {offsets = [0, 4, 0], sizes = [2, 1, 32], strides = [1, 1, 1]} : vector<2x8x32xf32> to vector<2x1x32xf32>
    %202 = vector.broadcast %201 : vector<2x1x32xf32> to vector<2x8x32xf32>
    %203 = arith.mulf %8, %202 : vector<2x8x32xf32>
    %204 = vector.extract_strided_slice %203 {offsets = [0, 0, 2], sizes = [2, 8, 30], strides = [1, 1, 1]} : vector<2x8x32xf32> to vector<2x8x30xf32>
    %205 = vector.extract_strided_slice %203 {offsets = [0, 0, 0], sizes = [2, 8, 2], strides = [1, 1, 1]} : vector<2x8x32xf32> to vector<2x8x2xf32>
    %206 = tpu.concatenate %204, %205 in 2 : vector<2x8x30xf32>, vector<2x8x2xf32> -> vector<2x8x32xf32>
    %207 = vector.extract_strided_slice %203 {offsets = [0, 0, 30], sizes = [2, 8, 2], strides = [1, 1, 1]} : vector<2x8x32xf32> to vector<2x8x2xf32>
    %208 = vector.extract_strided_slice %203 {offsets = [0, 0, 0], sizes = [2, 8, 30], strides = [1, 1, 1]} : vector<2x8x32xf32> to vector<2x8x30xf32>
    %209 = tpu.concatenate %207, %208 in 2 : vector<2x8x2xf32>, vector<2x8x30xf32> -> vector<2x8x32xf32>
    %210 = arith.select %45, %206, %209 : vector<2x8x32xi1>, vector<2x8x32xf32>
    %211 = arith.addf %203, %210 : vector<2x8x32xf32>
    %212 = vector.extract_strided_slice %211 {offsets = [0, 0, 1], sizes = [2, 8, 31], strides = [1, 1, 1]} : vector<2x8x32xf32> to vector<2x8x31xf32>
    %213 = vector.extract_strided_slice %211 {offsets = [0, 0, 0], sizes = [2, 8, 1], strides = [1, 1, 1]} : vector<2x8x32xf32> to vector<2x8x1xf32>
    %214 = tpu.concatenate %212, %213 in 2 : vector<2x8x31xf32>, vector<2x8x1xf32> -> vector<2x8x32xf32>
    %215 = vector.extract_strided_slice %211 {offsets = [0, 0, 31], sizes = [2, 8, 1], strides = [1, 1, 1]} : vector<2x8x32xf32> to vector<2x8x1xf32>
    %216 = vector.extract_strided_slice %211 {offsets = [0, 0, 0], sizes = [2, 8, 31], strides = [1, 1, 1]} : vector<2x8x32xf32> to vector<2x8x31xf32>
    %217 = tpu.concatenate %215, %216 in 2 : vector<2x8x1xf32>, vector<2x8x31xf32> -> vector<2x8x32xf32>
    %218 = arith.select %63, %214, %217 : vector<2x8x32xi1>, vector<2x8x32xf32>
    %219 = arith.addf %211, %218 : vector<2x8x32xf32>
    %cst_33 = arith.constant dense<0xFF800000> : vector<2x8xf32>
    %220 = vector.multi_reduction <maximumf>, %219, %cst_33 [2] : vector<2x8x32xf32> to vector<2x8xf32>
    %221 = vector.shape_cast %220 : vector<2x8xf32> to vector<2x8x1xf32>
    %222 = vector.broadcast %221 : vector<2x8x1xf32> to vector<2x8x32xf32>
    %223 = arith.subf %219, %222 : vector<2x8x32xf32>
    %224 = math.exp %223 : vector<2x8x32xf32>
    %cst_34 = arith.constant dense<0.000000e+00> : vector<2x8xf32>
    %225 = vector.multi_reduction <add>, %224, %cst_34 [2] : vector<2x8x32xf32> to vector<2x8xf32>
    %226 = vector.shape_cast %225 : vector<2x8xf32> to vector<2x8x1xf32>
    %cst_35 = arith.constant 2.500000e-01 : f32
    %227 = vector.broadcast %cst_35 : f32 to vector<2x8x1xf32>
    %228 = arith.mulf %226, %227 : vector<2x8x1xf32>
    %229 = vector.broadcast %228 : vector<2x8x1xf32> to vector<2x8x32xf32>
    %230 = arith.divf %224, %229 : vector<2x8x32xf32>
    %231 = vector.extract_strided_slice %10 {offsets = [0, 4, 0], sizes = [2, 1, 32], strides = [1, 1, 1]} : vector<2x8x32xf32> to vector<2x1x32xf32>
    %232 = vector.broadcast %231 : vector<2x1x32xf32> to vector<2x8x32xf32>
    %233 = arith.mulf %230, %232 : vector<2x8x32xf32>
    %234 = arith.addf %200, %233 : vector<2x8x32xf32>
    %235 = vector.extract_strided_slice %9 {offsets = [0, 5, 0], sizes = [2, 1, 32], strides = [1, 1, 1]} : vector<2x8x32xf32> to vector<2x1x32xf32>
    %236 = vector.broadcast %235 : vector<2x1x32xf32> to vector<2x8x32xf32>
    %237 = arith.mulf %8, %236 : vector<2x8x32xf32>
    %238 = vector.extract_strided_slice %237 {offsets = [0, 0, 2], sizes = [2, 8, 30], strides = [1, 1, 1]} : vector<2x8x32xf32> to vector<2x8x30xf32>
    %239 = vector.extract_strided_slice %237 {offsets = [0, 0, 0], sizes = [2, 8, 2], strides = [1, 1, 1]} : vector<2x8x32xf32> to vector<2x8x2xf32>
    %240 = tpu.concatenate %238, %239 in 2 : vector<2x8x30xf32>, vector<2x8x2xf32> -> vector<2x8x32xf32>
    %241 = vector.extract_strided_slice %237 {offsets = [0, 0, 30], sizes = [2, 8, 2], strides = [1, 1, 1]} : vector<2x8x32xf32> to vector<2x8x2xf32>
    %242 = vector.extract_strided_slice %237 {offsets = [0, 0, 0], sizes = [2, 8, 30], strides = [1, 1, 1]} : vector<2x8x32xf32> to vector<2x8x30xf32>
    %243 = tpu.concatenate %241, %242 in 2 : vector<2x8x2xf32>, vector<2x8x30xf32> -> vector<2x8x32xf32>
    %244 = arith.select %45, %240, %243 : vector<2x8x32xi1>, vector<2x8x32xf32>
    %245 = arith.addf %237, %244 : vector<2x8x32xf32>
    %246 = vector.extract_strided_slice %245 {offsets = [0, 0, 1], sizes = [2, 8, 31], strides = [1, 1, 1]} : vector<2x8x32xf32> to vector<2x8x31xf32>
    %247 = vector.extract_strided_slice %245 {offsets = [0, 0, 0], sizes = [2, 8, 1], strides = [1, 1, 1]} : vector<2x8x32xf32> to vector<2x8x1xf32>
    %248 = tpu.concatenate %246, %247 in 2 : vector<2x8x31xf32>, vector<2x8x1xf32> -> vector<2x8x32xf32>
    %249 = vector.extract_strided_slice %245 {offsets = [0, 0, 31], sizes = [2, 8, 1], strides = [1, 1, 1]} : vector<2x8x32xf32> to vector<2x8x1xf32>
    %250 = vector.extract_strided_slice %245 {offsets = [0, 0, 0], sizes = [2, 8, 31], strides = [1, 1, 1]} : vector<2x8x32xf32> to vector<2x8x31xf32>
    %251 = tpu.concatenate %249, %250 in 2 : vector<2x8x1xf32>, vector<2x8x31xf32> -> vector<2x8x32xf32>
    %252 = arith.select %63, %248, %251 : vector<2x8x32xi1>, vector<2x8x32xf32>
    %253 = arith.addf %245, %252 : vector<2x8x32xf32>
    %cst_36 = arith.constant dense<0xFF800000> : vector<2x8xf32>
    %254 = vector.multi_reduction <maximumf>, %253, %cst_36 [2] : vector<2x8x32xf32> to vector<2x8xf32>
    %255 = vector.shape_cast %254 : vector<2x8xf32> to vector<2x8x1xf32>
    %256 = vector.broadcast %255 : vector<2x8x1xf32> to vector<2x8x32xf32>
    %257 = arith.subf %253, %256 : vector<2x8x32xf32>
    %258 = math.exp %257 : vector<2x8x32xf32>
    %cst_37 = arith.constant dense<0.000000e+00> : vector<2x8xf32>
    %259 = vector.multi_reduction <add>, %258, %cst_37 [2] : vector<2x8x32xf32> to vector<2x8xf32>
    %260 = vector.shape_cast %259 : vector<2x8xf32> to vector<2x8x1xf32>
    %cst_38 = arith.constant 2.500000e-01 : f32
    %261 = vector.broadcast %cst_38 : f32 to vector<2x8x1xf32>
    %262 = arith.mulf %260, %261 : vector<2x8x1xf32>
    %263 = vector.broadcast %262 : vector<2x8x1xf32> to vector<2x8x32xf32>
    %264 = arith.divf %258, %263 : vector<2x8x32xf32>
    %265 = vector.extract_strided_slice %10 {offsets = [0, 5, 0], sizes = [2, 1, 32], strides = [1, 1, 1]} : vector<2x8x32xf32> to vector<2x1x32xf32>
    %266 = vector.broadcast %265 : vector<2x1x32xf32> to vector<2x8x32xf32>
    %267 = arith.mulf %264, %266 : vector<2x8x32xf32>
    %268 = arith.addf %234, %267 : vector<2x8x32xf32>
    %269 = vector.extract_strided_slice %9 {offsets = [0, 6, 0], sizes = [2, 1, 32], strides = [1, 1, 1]} : vector<2x8x32xf32> to vector<2x1x32xf32>
    %270 = vector.broadcast %269 : vector<2x1x32xf32> to vector<2x8x32xf32>
    %271 = arith.mulf %8, %270 : vector<2x8x32xf32>
    %272 = vector.extract_strided_slice %271 {offsets = [0, 0, 2], sizes = [2, 8, 30], strides = [1, 1, 1]} : vector<2x8x32xf32> to vector<2x8x30xf32>
    %273 = vector.extract_strided_slice %271 {offsets = [0, 0, 0], sizes = [2, 8, 2], strides = [1, 1, 1]} : vector<2x8x32xf32> to vector<2x8x2xf32>
    %274 = tpu.concatenate %272, %273 in 2 : vector<2x8x30xf32>, vector<2x8x2xf32> -> vector<2x8x32xf32>
    %275 = vector.extract_strided_slice %271 {offsets = [0, 0, 30], sizes = [2, 8, 2], strides = [1, 1, 1]} : vector<2x8x32xf32> to vector<2x8x2xf32>
    %276 = vector.extract_strided_slice %271 {offsets = [0, 0, 0], sizes = [2, 8, 30], strides = [1, 1, 1]} : vector<2x8x32xf32> to vector<2x8x30xf32>
    %277 = tpu.concatenate %275, %276 in 2 : vector<2x8x2xf32>, vector<2x8x30xf32> -> vector<2x8x32xf32>
    %278 = arith.select %45, %274, %277 : vector<2x8x32xi1>, vector<2x8x32xf32>
    %279 = arith.addf %271, %278 : vector<2x8x32xf32>
    %280 = vector.extract_strided_slice %279 {offsets = [0, 0, 1], sizes = [2, 8, 31], strides = [1, 1, 1]} : vector<2x8x32xf32> to vector<2x8x31xf32>
    %281 = vector.extract_strided_slice %279 {offsets = [0, 0, 0], sizes = [2, 8, 1], strides = [1, 1, 1]} : vector<2x8x32xf32> to vector<2x8x1xf32>
    %282 = tpu.concatenate %280, %281 in 2 : vector<2x8x31xf32>, vector<2x8x1xf32> -> vector<2x8x32xf32>
    %283 = vector.extract_strided_slice %279 {offsets = [0, 0, 31], sizes = [2, 8, 1], strides = [1, 1, 1]} : vector<2x8x32xf32> to vector<2x8x1xf32>
    %284 = vector.extract_strided_slice %279 {offsets = [0, 0, 0], sizes = [2, 8, 31], strides = [1, 1, 1]} : vector<2x8x32xf32> to vector<2x8x31xf32>
    %285 = tpu.concatenate %283, %284 in 2 : vector<2x8x1xf32>, vector<2x8x31xf32> -> vector<2x8x32xf32>
    %286 = arith.select %63, %282, %285 : vector<2x8x32xi1>, vector<2x8x32xf32>
    %287 = arith.addf %279, %286 : vector<2x8x32xf32>
    %cst_39 = arith.constant dense<0xFF800000> : vector<2x8xf32>
    %288 = vector.multi_reduction <maximumf>, %287, %cst_39 [2] : vector<2x8x32xf32> to vector<2x8xf32>
    %289 = vector.shape_cast %288 : vector<2x8xf32> to vector<2x8x1xf32>
    %290 = vector.broadcast %289 : vector<2x8x1xf32> to vector<2x8x32xf32>
    %291 = arith.subf %287, %290 : vector<2x8x32xf32>
    %292 = math.exp %291 : vector<2x8x32xf32>
    %cst_40 = arith.constant dense<0.000000e+00> : vector<2x8xf32>
    %293 = vector.multi_reduction <add>, %292, %cst_40 [2] : vector<2x8x32xf32> to vector<2x8xf32>
    %294 = vector.shape_cast %293 : vector<2x8xf32> to vector<2x8x1xf32>
    %cst_41 = arith.constant 2.500000e-01 : f32
    %295 = vector.broadcast %cst_41 : f32 to vector<2x8x1xf32>
    %296 = arith.mulf %294, %295 : vector<2x8x1xf32>
    %297 = vector.broadcast %296 : vector<2x8x1xf32> to vector<2x8x32xf32>
    %298 = arith.divf %292, %297 : vector<2x8x32xf32>
    %299 = vector.extract_strided_slice %10 {offsets = [0, 6, 0], sizes = [2, 1, 32], strides = [1, 1, 1]} : vector<2x8x32xf32> to vector<2x1x32xf32>
    %300 = vector.broadcast %299 : vector<2x1x32xf32> to vector<2x8x32xf32>
    %301 = arith.mulf %298, %300 : vector<2x8x32xf32>
    %302 = arith.addf %268, %301 : vector<2x8x32xf32>
    %303 = vector.extract_strided_slice %9 {offsets = [0, 7, 0], sizes = [2, 1, 32], strides = [1, 1, 1]} : vector<2x8x32xf32> to vector<2x1x32xf32>
    %304 = vector.broadcast %303 : vector<2x1x32xf32> to vector<2x8x32xf32>
    %305 = arith.mulf %8, %304 : vector<2x8x32xf32>
    %306 = vector.extract_strided_slice %305 {offsets = [0, 0, 2], sizes = [2, 8, 30], strides = [1, 1, 1]} : vector<2x8x32xf32> to vector<2x8x30xf32>
    %307 = vector.extract_strided_slice %305 {offsets = [0, 0, 0], sizes = [2, 8, 2], strides = [1, 1, 1]} : vector<2x8x32xf32> to vector<2x8x2xf32>
    %308 = tpu.concatenate %306, %307 in 2 : vector<2x8x30xf32>, vector<2x8x2xf32> -> vector<2x8x32xf32>
    %309 = vector.extract_strided_slice %305 {offsets = [0, 0, 30], sizes = [2, 8, 2], strides = [1, 1, 1]} : vector<2x8x32xf32> to vector<2x8x2xf32>
    %310 = vector.extract_strided_slice %305 {offsets = [0, 0, 0], sizes = [2, 8, 30], strides = [1, 1, 1]} : vector<2x8x32xf32> to vector<2x8x30xf32>
    %311 = tpu.concatenate %309, %310 in 2 : vector<2x8x2xf32>, vector<2x8x30xf32> -> vector<2x8x32xf32>
    %312 = arith.select %45, %308, %311 : vector<2x8x32xi1>, vector<2x8x32xf32>
    %313 = arith.addf %305, %312 : vector<2x8x32xf32>
    %314 = vector.extract_strided_slice %313 {offsets = [0, 0, 1], sizes = [2, 8, 31], strides = [1, 1, 1]} : vector<2x8x32xf32> to vector<2x8x31xf32>
    %315 = vector.extract_strided_slice %313 {offsets = [0, 0, 0], sizes = [2, 8, 1], strides = [1, 1, 1]} : vector<2x8x32xf32> to vector<2x8x1xf32>
    %316 = tpu.concatenate %314, %315 in 2 : vector<2x8x31xf32>, vector<2x8x1xf32> -> vector<2x8x32xf32>
    %317 = vector.extract_strided_slice %313 {offsets = [0, 0, 31], sizes = [2, 8, 1], strides = [1, 1, 1]} : vector<2x8x32xf32> to vector<2x8x1xf32>
    %318 = vector.extract_strided_slice %313 {offsets = [0, 0, 0], sizes = [2, 8, 31], strides = [1, 1, 1]} : vector<2x8x32xf32> to vector<2x8x31xf32>
    %319 = tpu.concatenate %317, %318 in 2 : vector<2x8x1xf32>, vector<2x8x31xf32> -> vector<2x8x32xf32>
    %320 = arith.select %63, %316, %319 : vector<2x8x32xi1>, vector<2x8x32xf32>
    %321 = arith.addf %313, %320 : vector<2x8x32xf32>
    %cst_42 = arith.constant dense<0xFF800000> : vector<2x8xf32>
    %322 = vector.multi_reduction <maximumf>, %321, %cst_42 [2] : vector<2x8x32xf32> to vector<2x8xf32>
    %323 = vector.shape_cast %322 : vector<2x8xf32> to vector<2x8x1xf32>
    %324 = vector.broadcast %323 : vector<2x8x1xf32> to vector<2x8x32xf32>
    %325 = arith.subf %321, %324 : vector<2x8x32xf32>
    %326 = math.exp %325 : vector<2x8x32xf32>
    %cst_43 = arith.constant dense<0.000000e+00> : vector<2x8xf32>
    %327 = vector.multi_reduction <add>, %326, %cst_43 [2] : vector<2x8x32xf32> to vector<2x8xf32>
    %328 = vector.shape_cast %327 : vector<2x8xf32> to vector<2x8x1xf32>
    %cst_44 = arith.constant 2.500000e-01 : f32
    %329 = vector.broadcast %cst_44 : f32 to vector<2x8x1xf32>
    %330 = arith.mulf %328, %329 : vector<2x8x1xf32>
    %331 = vector.broadcast %330 : vector<2x8x1xf32> to vector<2x8x32xf32>
    %332 = arith.divf %326, %331 : vector<2x8x32xf32>
    %333 = vector.extract_strided_slice %10 {offsets = [0, 7, 0], sizes = [2, 1, 32], strides = [1, 1, 1]} : vector<2x8x32xf32> to vector<2x1x32xf32>
    %334 = vector.broadcast %333 : vector<2x1x32xf32> to vector<2x8x32xf32>
    %335 = arith.mulf %332, %334 : vector<2x8x32xf32>
    %336 = arith.addf %302, %335 : vector<2x8x32xf32>
    %337 = vector.shape_cast %336 : vector<2x8x32xf32> to vector<16x32xf32>
    %c0_45 = arith.constant 0 : index
    %c0_46 = arith.constant 0 : index
    %338 = vector.load %arg3[%c0_45, %c0_46] : memref<32x32xf32, #tpu.memory_space<vmem>>, vector<32x32xf32>
    %cst_47 = arith.constant dense<0.000000e+00> : vector<16x32xf32>
    %339 = tpu.matmul %337, %338, %cst_47 {dimension_numbers = #tpu.dot_dimension_numbers<[1], [0], [0], [1], [0, 0, 1, 1], [], []>} : vector<16x32xf32>, vector<32x32xf32>, vector<16x32xf32> -> vector<16x32xf32>
    %c0_48 = arith.constant 0 : index
    %c0_49 = arith.constant 0 : index
    %340 = vector.load %arg4[%c0_48, %c0_49] : memref<1x32xf32, #tpu.memory_space<vmem>>, vector<1x32xf32>
    %341 = vector.broadcast %340 : vector<1x32xf32> to vector<16x32xf32>
    %342 = arith.addf %339, %341 : vector<16x32xf32>
    %c0_50 = arith.constant 0 : index
    %c0_51 = arith.constant 0 : index
    %343 = vector.load %arg5[%c0_50, %c0_51] : memref<16x32xf32, #tpu.memory_space<vmem>>, vector<16x32xf32>
    tpu.vector_store %arg5[%c0_50, %c0_51], %342 {strides = array<i32>} : memref<16x32xf32, #tpu.memory_space<vmem>>, vector<16x32xf32>,
    return
  }
  func.func @transform_0(%arg0: i32) -> (i32, i32) {
    %c0_i32 = arith.constant 0 : i32
    %c0_i32_0 = arith.constant 0 : i32
    %c0_i32_1 = arith.constant 0 : i32
    return %c0_i32, %c0_i32_0 : i32, i32
  }
  func.func @transform_1(%arg0: i32) -> (i32, i32) {
    %c0_i32 = arith.constant 0 : i32
    %c0_i32_0 = arith.constant 0 : i32
    %c0_i32_1 = arith.constant 0 : i32
    return %c0_i32, %c0_i32_0 : i32, i32
  }
  func.func @transform_2(%arg0: i32) -> (i32, i32) {
    %c0_i32 = arith.constant 0 : i32
    %c0_i32_0 = arith.constant 0 : i32
    %c0_i32_1 = arith.constant 0 : i32
    return %c0_i32, %c0_i32_0 : i32, i32
  }
  func.func @transform_3(%arg0: i32) -> (i32, i32) {
    %c0_i32 = arith.constant 0 : i32
    %c0_i32_0 = arith.constant 0 : i32
    %c0_i32_1 = arith.constant 0 : i32
    return %c0_i32, %c0_i32_0 : i32, i32
  }
  func.func @transform_4(%arg0: i32) -> (i32, i32) {
    %c0_i32 = arith.constant 0 : i32
    %c0_i32_0 = arith.constant 0 : i32
    %c0_i32_1 = arith.constant 0 : i32
    return %c0_i32, %c0_i32_0 : i32, i32
  }
}

</mosaic_0001>

<llo_original>
// kernel: tpu_custom_call.1
$region0: #{tpu_custom_call.1}
  #allocation0 [shape = 'u32[]', space=smem, size = 0x4, offset = 0x4, fixed_abs, tag = 'smem constant byte address 0x4 - core index']
  #allocation1 [shape = 'u32[144,128]{1,0:T(1,128)}', space=vmem, size = 0x12000, scoped, tag = 'internal scratch']
  %s0 = inlined_call_operand.hbm [shape: f32[16,32], index: 0, kind: input, shape index: {}]
  %s1 = inlined_call_operand.hbm [shape: f32[32,96], index: 1, kind: input, shape index: {}]
  %s2 = inlined_call_operand.hbm [shape: f32[32,32], index: 2, kind: input, shape index: {}]
  %s3 = inlined_call_operand.vmem [shape: f32[1,32], index: 3, kind: input, shape index: {}]
  %s4 = inlined_call_operand.hbm [shape: f32[16,32], index: 4, kind: output, shape index: {}]
  %s5 = sld [smem:[#allocation0]]
  $region38: #{tpu_custom_call.1} parent=0
    _
  %s7 = ssub.s32 1, %s5
  %s8 = scalar_select 0, %s7, %s5
  $region1: #{tpu_custom_call.1} parent=0
    #allocation2 [shape = 'u8[8192]{0}', space=vmem, size = 0x2000, scoped, tag = 'input window, operand 0, single buffered']
    #allocation3 [shape = 's32[1]{0}', space=sflag, size = 0x4, scoped, tag = 'scoped memory for tpu_custom_call.1']
    #allocation4 [shape = 's32[1]{0}', space=sflag, size = 0x4, scoped, tag = 'scoped memory for tpu_custom_call.1']
    #allocation5 [shape = 'u8[16384]{0}', space=vmem, size = 0x4000, scoped, tag = 'input window, operand 1, single buffered']
    #allocation6 [shape = 's32[1]{0}', space=sflag, size = 0x4, scoped, tag = 'scoped memory for tpu_custom_call.1']
    #allocation7 [shape = 'u8[16384]{0}', space=vmem, size = 0x4000, scoped, tag = 'input window, operand 2, single buffered']
    #allocation8 [shape = 'u8[8192]{0}', space=vmem, size = 0x2000, scoped, tag = 'output window, operand 0, single buffered']
    %9 = vsyncpa [#allocation3], 0
    %10 = vsyncpa [#allocation6], 0
    %11 = vsyncpa [#allocation4], 0
    // Predicated region
    $region2: #{tpu_custom_call.1} parent=1 // pred_check
      _
    $region3: #{tpu_custom_call.1} parent=1 // pred_check_branch
      %13 = sbr.rel (0) target = $region5
    $region4: #{tpu_custom_call.1} parent=1 // pred_region
      %s15 = ssub.s32 256, 256
      %16 = vsyncadd [#allocation3], %s15
      %s17 = sshll.u32 [#allocation2], 4
      %s18 = int_to_ptr.vmem [resolvable:$true] %s17
      %23 = dma.hbm_to_vmem [thread:$0]  %s0, 256, %s18, [#allocation3], 128, 128, 8
    $region5: #{tpu_custom_call.1} parent=1 // pred_fallthru
      _
    // Predicated region
    $region6: #{tpu_custom_call.1} parent=1 // pred_check
      _
    $region7: #{tpu_custom_call.1} parent=1 // pred_check_branch
      %25 = sbr.rel (0) target = $region9
    $region8: #{tpu_custom_call.1} parent=1 // pred_region
      %s27 = ssub.s32 512, 512
      %28 = vsyncadd [#allocation6], %s27
      %s29 = sshll.u32 [#allocation5], 4
      %s30 = int_to_ptr.vmem [resolvable:$true] %s29
      %35 = dma.hbm_to_vmem [thread:$0]  %s1, 512, %s30, [#allocation6], 128, 128, 8
    $region9: #{tpu_custom_call.1} parent=1 // pred_fallthru
      _
    // Predicated region
    $region10: #{tpu_custom_call.1} parent=1 // pred_check
      _
    $region11: #{tpu_custom_call.1} parent=1 // pred_check_branch
      %37 = sbr.rel (0) target = $region13
    $region12: #{tpu_custom_call.1} parent=1 // pred_region
      %s39 = ssub.s32 512, 512
      %40 = vsyncadd [#allocation6], %s39
      %s41 = sshll.u32 [#allocation7], 4
      %s42 = int_to_ptr.vmem [resolvable:$true] %s41
      %47 = dma.hbm_to_vmem [thread:$0]  %s2, 512, %s42, [#allocation6], 128, 128, 8
    $region13: #{tpu_custom_call.1} parent=1 // pred_fallthru
      _
    // Predicated region
    $region14: #{tpu_custom_call.1} parent=1 // pred_check
      _
    $region15: #{tpu_custom_call.1} parent=1 // pred_check_branch
      %49 = sbr.rel (0) target = $region17
    $region16: #{tpu_custom_call.1} parent=1 // pred_region
      _
    $region17: #{tpu_custom_call.1} parent=1 // pred_fallthru
      _
    // Predicated region
    $region18: #{tpu_custom_call.1} parent=1 // pred_check
      _
    $region19: #{tpu_custom_call.1} parent=1 // pred_check_branch
      %51 = sbr.rel (0) target = $region21
    $region20: #{tpu_custom_call.1} parent=1 // pred_region
      %52 = dma.done [#allocation3], 256
    $region21: #{tpu_custom_call.1} parent=1 // pred_fallthru
      _
    // Predicated region
    $region22: #{tpu_custom_call.1} parent=1 // pred_check
      _
    $region23: #{tpu_custom_call.1} parent=1 // pred_check_branch
      %54 = sbr.rel (0) target = $region25
    $region24: #{tpu_custom_call.1} parent=1 // pred_region
      %55 = dma.done [#allocation6], 512
    $region25: #{tpu_custom_call.1} parent=1 // pred_fallthru
      _
    // Predicated region
    $region26: #{tpu_custom_call.1} parent=1 // pred_check
      _
    $region27: #{tpu_custom_call.1} parent=1 // pred_check_branch
      %57 = sbr.rel (0) target = $region29
    $region28: #{tpu_custom_call.1} parent=1 // pred_region
      %58 = dma.done [#allocation6], 512
    $region29: #{tpu_custom_call.1} parent=1 // pred_fallthru
      _
    %v59 = vld [vmem:[#allocation2] sm:$0xff]
    %v60 = vld [vmem:[#allocation2 + $0x8] sm:$0xff]
    %v61 = vld [vmem:[#allocation5] sm:$0xff]
    %v62 = vld [vmem:[#allocation5 + $0x8] sm:$0xff]
    %v63 = vld [vmem:[#allocation5 + $0x10] sm:$0xff]
    %v64 = vld [vmem:[#allocation5 + $0x18] sm:$0xff]
    %vm65 = vcmask 261120
    %v67 = vsel %vm65, %v59, 0
    %v70 = vsel %vm65, %v60, 0
    %72 = vmatprep.subr.mxu0 0.0
    %73 = vmatpush1.msra.mxu0 %v61
    %74 = vmatprep.subr.mxu0 0.0
    %75 = vmatpush1.msra.mxu0 %v62
    %76 = vmatprep.subr.mxu0 0.0
    %77 = vmatpush1.msra.mxu0 %v63
    %78 = vmatprep.subr.mxu0 0.0
    %79 = vmatpush1.msra.mxu0 %v64
    %80 = vmatprep.subr.mxu0 0.0
    %81 = vmatpush1.msra.mxu0 0.0
    %82 = vmatprep.subr.mxu0 0.0
    %83 = vmatpush1.msra.mxu0 0.0
    %84 = vmatprep.subr.mxu0 0.0
    %85 = vmatpush1.msra.mxu0 0.0
    %86 = vmatprep.subr.mxu0 0.0
    %87 = vmatpush1.msra.mxu0 0.0
    %88 = vmatprep.subr.mxu0 0.0
    %89 = vmatpush1.msra.mxu0 0.0
    %90 = vmatprep.subr.mxu0 0.0
    %91 = vmatpush1.msra.mxu0 0.0
    %92 = vmatprep.subr.mxu0 0.0
    %93 = vmatpush1.msra.mxu0 0.0
    %94 = vmatprep.subr.mxu0 0.0
    %95 = vmatpush1.msra.mxu0 0.0
    %96 = vmatprep.subr.mxu0 0.0
    %97 = vmatpush1.msra.mxu0 0.0
    %98 = vmatprep.subr.mxu0 0.0
    %99 = vmatpush1.msra.mxu0 0.0
    %100 = vmatprep.subr.mxu0 0.0
    %101 = vmatpush1.msra.mxu0 0.0
    %102 = vmatprep.subr.mxu0 0.0
    %103 = vmatpush1.msra.mxu0 0.0
    %104 = vmatprep.subr.mxu0 0.0
    %105 = vmatpush1.msra.mxu0 0.0
    %106 = vmatprep.subr.mxu0 0.0
    %107 = vmatpush1.msra.mxu0 0.0
    %108 = vmatprep.subr.mxu0 0.0
    %109 = vmatpush1.msra.mxu0 0.0
    %110 = vmatprep.subr.mxu0 0.0
    %111 = vmatpush1.msra.mxu0 0.0
    %112 = vmatprep.subr.mxu0 0.0
    %113 = vmatpush1.msra.mxu0 0.0
    %114 = vmatprep.subr.mxu0 0.0
    %115 = vmatpush1.msra.mxu0 0.0
    %116 = vmatprep.subr.mxu0 0.0
    %117 = vmatpush1.msra.mxu0 0.0
    %118 = vmatprep.subr.mxu0 0.0
    %119 = vmatpush1.msra.mxu0 0.0
    %120 = vmatprep.subr.mxu0 0.0
    %121 = vmatpush1.msra.mxu0 0.0
    %122 = vmatprep.subr.mxu0 0.0
    %123 = vmatpush1.msra.mxu0 0.0
    %124 = vmatprep.subr.mxu0 0.0
    %125 = vmatpush1.msra.mxu0 0.0
    %126 = vmatprep.subr.mxu0 0.0
    %127 = vmatpush1.msra.mxu0 0.0
    %128 = vmatprep.subr.mxu0 0.0
    %129 = vmatpush1.msra.mxu0 0.0
    %130 = vmatprep.subr.mxu0 0.0
    %131 = vmatpush1.msra.mxu0 0.0
    %132 = vmatprep.subr.mxu0 0.0
    %133 = vmatpush1.msra.mxu0 0.0
    %134 = vmatprep.subr.mxu0 0.0
    %135 = vmatpush1.msra.mxu0 0.0
    %136 = vmatprep.mubr.f32.mxu0 0.0
    %137 = vmatmul.mubr.f32.gmra.mrb[0].mxu0 %v67
    %v138 = vpop.f32.mrb[0].mxu0
    %v139 = vadd.f32 0.0, %v138
    %v140 = vpop.f32.mrb[0].mxu0
    %141 = vmatprep.mubr.f32.mxu0 0.0
    %142 = vmatmul.mubr.f32.gmra.mrb[0].mxu0 %v70
    %v143 = vpop.f32.mrb[0].mxu0
    %v144 = vadd.f32 0.0, %v143
    %v145 = vpop.f32.mrb[0].mxu0
    %146 = vdwg.mxu0
    %v147 = vmul.f32 %v139, 0.5
    %v148 = vmul.f32 %v144, 0.5
    %v149 = vlaneseq
    %v150 = vand.u32 %v149, 127
    %vm151 = vcmp.lt.s32.totalorder %v150, 0
    %v152 = vsub.s32 0, %v150
    %v153 = vsel %vm151, %v152, %v150
    %v154 = vshrl.u32 %v153, 2
    %v155 = vand.u32 %v153, 3
    %v156 = vsub.s32 0, %v155
    %v157 = vsel %vm151, %v156, %v155
    %vm158 = vcmp.ne.s32.totalorder %v157, 0
    %vm159 = vcmp.lt.s32.totalorder %v157, 0
    %vm160 = vmand %vm159, %vm158
    %v161 = vadd.s32 %v157, 4
    %v162 = vsel %vm160, %v161, %v157
    %vm163 = vcmp.lt.s32.totalorder %v162, 0
    %v164 = vsub.s32 0, %v162
    %v165 = vsel %vm163, %v164, %v162
    %v166 = vshrl.u32 %v165, 2
    %v167 = vand.u32 %v165, 3
    %v168 = vsub.s32 0, %v167
    %v169 = vsel %vm163, %v168, %v167
    %vm170 = vcmp.ne.s32.totalorder %v169, 0
    %vm171 = vcmp.lt.s32.totalorder %v169, 0
    %vm172 = vmand %vm171, %vm170
    %v173 = vadd.s32 %v169, 4
    %v174 = vsel %vm172, %v173, %v169
    %vm175 = vcmp.lt.s32.totalorder %v174, 2
    %vm176 = vcmp.lt.s32.totalorder %v162, 0
    %v177 = vsub.s32 0, %v162
    %v178 = vsel %vm176, %v177, %v162
    %v179 = vshrl.u32 %v178, 1
    %v180 = vand.u32 %v178, 1
    %v181 = vsub.s32 0, %v180
    %v182 = vsel %vm176, %v181, %v180
    %vm183 = vcmp.ne.s32.totalorder %v182, 0
    %vm184 = vcmp.lt.s32.totalorder %v182, 0
    %vm185 = vmand %vm184, %vm183
    %v186 = vadd.s32 %v182, 2
    %v187 = vsel %vm185, %v186, %v182
    %vm188 = vcmp.lt.s32.totalorder %v187, 1
    %v189 = vlaneseq
    %v190 = vshrl.u32 %v189, 7
    %v191 = vsub.s32 0, %v190
    %v192 = vrot.slane %v139, %v191
    %v193 = vlaneseq
    %v194 = vshrl.u32 %v193, 7
    %v195 = vsub.s32 0, %v194
    %v196 = vrot.slane %v144, %v195
    %199 = vrot.lane.b32.xlu0 %v192, 96
    %v200 = vpop.permute.xlu0 %199
    %201 = vrot.lane.b32.xlu0 %v196, 96
    %v202 = vpop.permute.xlu0 %201
    %v205 = vmul.f32 %v147, %v200
    %v206 = vmul.f32 %v148, %v202
    %209 = vrot.lane.b32.xlu0 %v205, 126
    %v210 = vpop.permute.xlu0 %209
    %211 = vrot.lane.b32.xlu0 %v206, 126
    %v212 = vpop.permute.xlu0 %211
    %215 = vrot.lane.b32.xlu0 %v205, 30
    %v216 = vpop.permute.xlu0 %215
    %217 = vrot.lane.b32.xlu0 %v206, 30
    %v218 = vpop.permute.xlu0 %217
    %vm221 = vcmask 244736
    %v222 = vsel %vm221, %v210, %v216
    %v223 = vsel %vm221, %v212, %v218
    %224 = vrot.lane.b32.xlu0 %v205, 98
    %v225 = vpop.permute.xlu0 %224
    %226 = vrot.lane.b32.xlu0 %v206, 98
    %v227 = vpop.permute.xlu0 %226
    %230 = vrot.lane.b32.xlu0 %v205, 2
    %v231 = vpop.permute.xlu0 %230
    %232 = vrot.lane.b32.xlu0 %v206, 2
    %v233 = vpop.permute.xlu0 %232
    %vm236 = vcmask 15360
    %v237 = vsel %vm236, %v225, %v231
    %v238 = vsel %vm236, %v227, %v233
    %v239 = vsel %vm175, %v222, %v237
    %v240 = vsel %vm175, %v223, %v238
    %v241 = vadd.f32 %v205, %v239
    %v242 = vadd.f32 %v206, %v240
    %245 = vrot.lane.b32.xlu0 %v241, 127
    %v246 = vpop.permute.xlu0 %245
    %247 = vrot.lane.b32.xlu0 %v242, 127
    %v248 = vpop.permute.xlu0 %247
    %251 = vrot.lane.b32.xlu0 %v241, 31
    %v252 = vpop.permute.xlu0 %251
    %253 = vrot.lane.b32.xlu0 %v242, 31
    %v254 = vpop.permute.xlu0 %253
    %vm257 = vcmask 252928
    %v258 = vsel %vm257, %v246, %v252
    %v259 = vsel %vm257, %v248, %v254
    %260 = vrot.lane.b32.xlu0 %v241, 97
    %v261 = vpop.permute.xlu0 %260
    %262 = vrot.lane.b32.xlu0 %v242, 97
    %v263 = vpop.permute.xlu0 %262
    %266 = vrot.lane.b32.xlu0 %v241, 1
    %v267 = vpop.permute.xlu0 %266
    %268 = vrot.lane.b32.xlu0 %v242, 1
    %v269 = vpop.permute.xlu0 %268
    %vm272 = vcmask 7168
    %v273 = vsel %vm272, %v261, %v267
    %v274 = vsel %vm272, %v263, %v269
    %v275 = vsel %vm188, %v258, %v273
    %v276 = vsel %vm188, %v259, %v274
    %v277 = vadd.f32 %v241, %v275
    %v278 = vadd.f32 %v242, %v276
    %v279 = vsel %vm65, %v277, -inf
    %280 = vmax.xlane.f32.xlu0 %v279
    %v281 = vpop.xlane.xlu0 %280
    %v282 = vsel %vm65, %v278, -inf
    %283 = vmax.xlane.f32.xlu0 %v282
    %v284 = vpop.xlane.xlu0 %283
    %v285 = vsub.f32 %v277, %v281
    %v286 = vsub.f32 %v278, %v284
    %v287 = vmul.f32 %v285, 1.442695
    %v288 = vpow.pop %v287
    %v289 = vmul.f32 %v286, 1.442695
    %v290 = vpow.pop %v289
    %v291 = vsel %vm65, %v288, 0.0
    %292 = vadd.xlane.f32.xlu0 %v291
    %v293 = vpop.xlane.xlu0 %292
    %v294 = vsel %vm65, %v290, 0.0
    %295 = vadd.xlane.f32.xlu0 %v294
    %v296 = vpop.xlane.xlu0 %295
    %v297 = vmul.f32 %v293, 0.25
    %v298 = vmul.f32 %v296, 0.25
    %v299 = vrcp.pop %v297
    %v300 = vmul.f32 %v288, %v299
    %v301 = vrcp.pop %v298
    %v302 = vmul.f32 %v290, %v301
    %303 = vrot.lane.b32.xlu0 %v192, 64
    %v304 = vpop.permute.xlu0 %303
    %305 = vrot.lane.b32.xlu0 %v196, 64
    %v306 = vpop.permute.xlu0 %305
    %v309 = vmul.f32 %v300, %v304
    %v310 = vmul.f32 %v302, %v306
    %v311 = vadd.f32 %v309, 0.0
    %v312 = vadd.f32 %v310, 0.0
    %v313 = vlaneseq
    %v314 = vshrl.u32 %v313, 7
    %v315 = vsub.s32 1, %v314
    %v316 = vrot.slane %v139, %v315
    %v317 = vlaneseq
    %v318 = vshrl.u32 %v317, 7
    %v319 = vsub.s32 1, %v318
    %v320 = vrot.slane %v144, %v319
    %323 = vrot.lane.b32.xlu0 %v316, 96
    %v324 = vpop.permute.xlu0 %323
    %325 = vrot.lane.b32.xlu0 %v320, 96
    %v326 = vpop.permute.xlu0 %325
    %v329 = vmul.f32 %v147, %v324
    %v330 = vmul.f32 %v148, %v326
    %333 = vrot.lane.b32.xlu0 %v329, 126
    %v334 = vpop.permute.xlu0 %333
    %335 = vrot.lane.b32.xlu0 %v330, 126
    %v336 = vpop.permute.xlu0 %335
    %339 = vrot.lane.b32.xlu0 %v329, 30
    %v340 = vpop.permute.xlu0 %339
    %341 = vrot.lane.b32.xlu0 %v330, 30
    %v342 = vpop.permute.xlu0 %341
    %v345 = vsel %vm221, %v334, %v340
    %v346 = vsel %vm221, %v336, %v342
    %347 = vrot.lane.b32.xlu0 %v329, 98
    %v348 = vpop.permute.xlu0 %347
    %349 = vrot.lane.b32.xlu0 %v330, 98
    %v350 = vpop.permute.xlu0 %349
    %353 = vrot.lane.b32.xlu0 %v329, 2
    %v354 = vpop.permute.xlu0 %353
    %355 = vrot.lane.b32.xlu0 %v330, 2
    %v356 = vpop.permute.xlu0 %355
    %v359 = vsel %vm236, %v348, %v354
    %v360 = vsel %vm236, %v350, %v356
    %v361 = vsel %vm175, %v345, %v359
    %v362 = vsel %vm175, %v346, %v360
    %v363 = vadd.f32 %v329, %v361
    %v364 = vadd.f32 %v330, %v362
    %367 = vrot.lane.b32.xlu0 %v363, 127
    %v368 = vpop.permute.xlu0 %367
    %369 = vrot.lane.b32.xlu0 %v364, 127
    %v370 = vpop.permute.xlu0 %369
    %373 = vrot.lane.b32.xlu0 %v363, 31
    %v374 = vpop.permute.xlu0 %373
    %375 = vrot.lane.b32.xlu0 %v364, 31
    %v376 = vpop.permute.xlu0 %375
    %v379 = vsel %vm257, %v368, %v374
    %v380 = vsel %vm257, %v370, %v376
    %381 = vrot.lane.b32.xlu0 %v363, 97
    %v382 = vpop.permute.xlu0 %381
    %383 = vrot.lane.b32.xlu0 %v364, 97
    %v384 = vpop.permute.xlu0 %383
    %387 = vrot.lane.b32.xlu0 %v363, 1
    %v388 = vpop.permute.xlu0 %387
    %389 = vrot.lane.b32.xlu0 %v364, 1
    %v390 = vpop.permute.xlu0 %389
    %v393 = vsel %vm272, %v382, %v388
    %v394 = vsel %vm272, %v384, %v390
    %v395 = vsel %vm188, %v379, %v393
    %v396 = vsel %vm188, %v380, %v394
    %v397 = vadd.f32 %v363, %v395
    %v398 = vadd.f32 %v364, %v396
    %v399 = vsel %vm65, %v397, -inf
    %400 = vmax.xlane.f32.xlu0 %v399
    %v401 = vpop.xlane.xlu0 %400
    %v402 = vsel %vm65, %v398, -inf
    %403 = vmax.xlane.f32.xlu0 %v402
    %v404 = vpop.xlane.xlu0 %403
    %v405 = vsub.f32 %v397, %v401
    %v406 = vsub.f32 %v398, %v404
    %v407 = vmul.f32 %v405, 1.442695
    %v408 = vpow.pop %v407
    %v409 = vmul.f32 %v406, 1.442695
    %v410 = vpow.pop %v409
    %v411 = vsel %vm65, %v408, 0.0
    %412 = vadd.xlane.f32.xlu0 %v411
    %v413 = vpop.xlane.xlu0 %412
    %v414 = vsel %vm65, %v410, 0.0
    %415 = vadd.xlane.f32.xlu0 %v414
    %v416 = vpop.xlane.xlu0 %415
    %v417 = vmul.f32 %v413, 0.25
    %v418 = vmul.f32 %v416, 0.25
    %v419 = vrcp.pop %v417
    %v420 = vmul.f32 %v408, %v419
    %v421 = vrcp.pop %v418
    %v422 = vmul.f32 %v410, %v421
    %423 = vrot.lane.b32.xlu0 %v316, 64
    %v424 = vpop.permute.xlu0 %423
    %425 = vrot.lane.b32.xlu0 %v320, 64
    %v426 = vpop.permute.xlu0 %425
    %v429 = vmul.f32 %v420, %v424
    %v430 = vmul.f32 %v422, %v426
    %v431 = vadd.f32 %v311, %v429
    %v432 = vadd.f32 %v312, %v430
    %v433 = vlaneseq
    %v434 = vshrl.u32 %v433, 7
    %v435 = vsub.s32 2, %v434
    %v436 = vrot.slane %v139, %v435
    %v437 = vlaneseq
    %v438 = vshrl.u32 %v437, 7
    %v439 = vsub.s32 2, %v438
    %v440 = vrot.slane %v144, %v439
    %443 = vrot.lane.b32.xlu0 %v436, 96
    %v444 = vpop.permute.xlu0 %443
    %445 = vrot.lane.b32.xlu0 %v440, 96
    %v446 = vpop.permute.xlu0 %445
    %v449 = vmul.f32 %v147, %v444
    %v450 = vmul.f32 %v148, %v446
    %453 = vrot.lane.b32.xlu0 %v449, 126
    %v454 = vpop.permute.xlu0 %453
    %455 = vrot.lane.b32.xlu0 %v450, 126
    %v456 = vpop.permute.xlu0 %455
    %459 = vrot.lane.b32.xlu0 %v449, 30
    %v460 = vpop.permute.xlu0 %459
    %461 = vrot.lane.b32.xlu0 %v450, 30
    %v462 = vpop.permute.xlu0 %461
    %v465 = vsel %vm221, %v454, %v460
    %v466 = vsel %vm221, %v456, %v462
    %467 = vrot.lane.b32.xlu0 %v449, 98
    %v468 = vpop.permute.xlu0 %467
    %469 = vrot.lane.b32.xlu0 %v450, 98
    %v470 = vpop.permute.xlu0 %469
    %473 = vrot.lane.b32.xlu0 %v449, 2
    %v474 = vpop.permute.xlu0 %473
    %475 = vrot.lane.b32.xlu0 %v450, 2
    %v476 = vpop.permute.xlu0 %475
    %v479 = vsel %vm236, %v468, %v474
    %v480 = vsel %vm236, %v470, %v476
    %v481 = vsel %vm175, %v465, %v479
    %v482 = vsel %vm175, %v466, %v480
    %v483 = vadd.f32 %v449, %v481
    %v484 = vadd.f32 %v450, %v482
    %487 = vrot.lane.b32.xlu0 %v483, 127
    %v488 = vpop.permute.xlu0 %487
    %489 = vrot.lane.b32.xlu0 %v484, 127
    %v490 = vpop.permute.xlu0 %489
    %493 = vrot.lane.b32.xlu0 %v483, 31
    %v494 = vpop.permute.xlu0 %493
    %495 = vrot.lane.b32.xlu0 %v484, 31
    %v496 = vpop.permute.xlu0 %495
    %v499 = vsel %vm257, %v488, %v494
    %v500 = vsel %vm257, %v490, %v496
    %501 = vrot.lane.b32.xlu0 %v483, 97
    %v502 = vpop.permute.xlu0 %501
    %503 = vrot.lane.b32.xlu0 %v484, 97
    %v504 = vpop.permute.xlu0 %503
    %507 = vrot.lane.b32.xlu0 %v483, 1
    %v508 = vpop.permute.xlu0 %507
    %509 = vrot.lane.b32.xlu0 %v484, 1
    %v510 = vpop.permute.xlu0 %509
    %v513 = vsel %vm272, %v502, %v508
    %v514 = vsel %vm272, %v504, %v510
    %v515 = vsel %vm188, %v499, %v513
    %v516 = vsel %vm188, %v500, %v514
    %v517 = vadd.f32 %v483, %v515
    %v518 = vadd.f32 %v484, %v516
    %v519 = vsel %vm65, %v517, -inf
    %520 = vmax.xlane.f32.xlu0 %v519
    %v521 = vpop.xlane.xlu0 %520
    %v522 = vsel %vm65, %v518, -inf
    %523 = vmax.xlane.f32.xlu0 %v522
    %v524 = vpop.xlane.xlu0 %523
    %v525 = vsub.f32 %v517, %v521
    %v526 = vsub.f32 %v518, %v524
    %v527 = vmul.f32 %v525, 1.442695
    %v528 = vpow.pop %v527
    %v529 = vmul.f32 %v526, 1.442695
    %v530 = vpow.pop %v529
    %v531 = vsel %vm65, %v528, 0.0
    %532 = vadd.xlane.f32.xlu0 %v531
    %v533 = vpop.xlane.xlu0 %532
    %v534 = vsel %vm65, %v530, 0.0
    %535 = vadd.xlane.f32.xlu0 %v534
    %v536 = vpop.xlane.xlu0 %535
    %v537 = vmul.f32 %v533, 0.25
    %v538 = vmul.f32 %v536, 0.25
    %v539 = vrcp.pop %v537
    %v540 = vmul.f32 %v528, %v539
    %v541 = vrcp.pop %v538
    %v542 = vmul.f32 %v530, %v541
    %543 = vrot.lane.b32.xlu0 %v436, 64
    %v544 = vpop.permute.xlu0 %543
    %545 = vrot.lane.b32.xlu0 %v440, 64
    %v546 = vpop.permute.xlu0 %545
    %v549 = vmul.f32 %v540, %v544
    %v550 = vmul.f32 %v542, %v546
    %v551 = vadd.f32 %v431, %v549
    %v552 = vadd.f32 %v432, %v550
    %v553 = vlaneseq
    %v554 = vshrl.u32 %v553, 7
    %v555 = vsub.s32 3, %v554
    %v556 = vrot.slane %v139, %v555
    %v557 = vlaneseq
    %v558 = vshrl.u32 %v557, 7
    %v559 = vsub.s32 3, %v558
    %v560 = vrot.slane %v144, %v559
    %563 = vrot.lane.b32.xlu0 %v556, 96
    %v564 = vpop.permute.xlu0 %563
    %565 = vrot.lane.b32.xlu0 %v560, 96
    %v566 = vpop.permute.xlu0 %565
    %v569 = vmul.f32 %v147, %v564
    %v570 = vmul.f32 %v148, %v566
    %573 = vrot.lane.b32.xlu0 %v569, 126
    %v574 = vpop.permute.xlu0 %573
    %575 = vrot.lane.b32.xlu0 %v570, 126
    %v576 = vpop.permute.xlu0 %575
    %579 = vrot.lane.b32.xlu0 %v569, 30
    %v580 = vpop.permute.xlu0 %579
    %581 = vrot.lane.b32.xlu0 %v570, 30
    %v582 = vpop.permute.xlu0 %581
    %v585 = vsel %vm221, %v574, %v580
    %v586 = vsel %vm221, %v576, %v582
    %587 = vrot.lane.b32.xlu0 %v569, 98
    %v588 = vpop.permute.xlu0 %587
    %589 = vrot.lane.b32.xlu0 %v570, 98
    %v590 = vpop.permute.xlu0 %589
    %593 = vrot.lane.b32.xlu0 %v569, 2
    %v594 = vpop.permute.xlu0 %593
    %595 = vrot.lane.b32.xlu0 %v570, 2
    %v596 = vpop.permute.xlu0 %595
    %v599 = vsel %vm236, %v588, %v594
    %v600 = vsel %vm236, %v590, %v596
    %v601 = vsel %vm175, %v585, %v599
    %v602 = vsel %vm175, %v586, %v600
    %v603 = vadd.f32 %v569, %v601
    %v604 = vadd.f32 %v570, %v602
    %607 = vrot.lane.b32.xlu0 %v603, 127
    %v608 = vpop.permute.xlu0 %607
    %609 = vrot.lane.b32.xlu0 %v604, 127
    %v610 = vpop.permute.xlu0 %609
    %613 = vrot.lane.b32.xlu0 %v603, 31
    %v614 = vpop.permute.xlu0 %613
    %615 = vrot.lane.b32.xlu0 %v604, 31
    %v616 = vpop.permute.xlu0 %615
    %v619 = vsel %vm257, %v608, %v614
    %v620 = vsel %vm257, %v610, %v616
    %621 = vrot.lane.b32.xlu0 %v603, 97
    %v622 = vpop.permute.xlu0 %621
    %623 = vrot.lane.b32.xlu0 %v604, 97
    %v624 = vpop.permute.xlu0 %623
    %627 = vrot.lane.b32.xlu0 %v603, 1
    %v628 = vpop.permute.xlu0 %627
    %629 = vrot.lane.b32.xlu0 %v604, 1
    %v630 = vpop.permute.xlu0 %629
    %v633 = vsel %vm272, %v622, %v628
    %v634 = vsel %vm272, %v624, %v630
    %v635 = vsel %vm188, %v619, %v633
    %v636 = vsel %vm188, %v620, %v634
    %v637 = vadd.f32 %v603, %v635
    %v638 = vadd.f32 %v604, %v636
    %v639 = vsel %vm65, %v637, -inf
    %640 = vmax.xlane.f32.xlu0 %v639
    %v641 = vpop.xlane.xlu0 %640
    %v642 = vsel %vm65, %v638, -inf
    %643 = vmax.xlane.f32.xlu0 %v642
    %v644 = vpop.xlane.xlu0 %643
    %v645 = vsub.f32 %v637, %v641
    %v646 = vsub.f32 %v638, %v644
    %v647 = vmul.f32 %v645, 1.442695
    %v648 = vpow.pop %v647
    %v649 = vmul.f32 %v646, 1.442695
    %v650 = vpow.pop %v649
    %v651 = vsel %vm65, %v648, 0.0
    %652 = vadd.xlane.f32.xlu0 %v651
    %v653 = vpop.xlane.xlu0 %652
    %v654 = vsel %vm65, %v650, 0.0
    %655 = vadd.xlane.f32.xlu0 %v654
    %v656 = vpop.xlane.xlu0 %655
    %v657 = vmul.f32 %v653, 0.25
    %v658 = vmul.f32 %v656, 0.25
    %v659 = vrcp.pop %v657
    %v660 = vmul.f32 %v648, %v659
    %v661 = vrcp.pop %v658
    %v662 = vmul.f32 %v650, %v661
    %663 = vrot.lane.b32.xlu0 %v556, 64
    %v664 = vpop.permute.xlu0 %663
    %665 = vrot.lane.b32.xlu0 %v560, 64
    %v666 = vpop.permute.xlu0 %665
    %v669 = vmul.f32 %v660, %v664
    %v670 = vmul.f32 %v662, %v666
    %v671 = vadd.f32 %v551, %v669
    %v672 = vadd.f32 %v552, %v670
    %v673 = vlaneseq
    %v674 = vshrl.u32 %v673, 7
    %v675 = vsub.s32 4, %v674
    %v676 = vrot.slane %v139, %v675
    %v677 = vlaneseq
    %v678 = vshrl.u32 %v677, 7
    %v679 = vsub.s32 4, %v678
    %v680 = vrot.slane %v144, %v679
    %683 = vrot.lane.b32.xlu0 %v676, 96
    %v684 = vpop.permute.xlu0 %683
    %685 = vrot.lane.b32.xlu0 %v680, 96
    %v686 = vpop.permute.xlu0 %685
    %v689 = vmul.f32 %v147, %v684
    %v690 = vmul.f32 %v148, %v686
    %693 = vrot.lane.b32.xlu0 %v689, 126
    %v694 = vpop.permute.xlu0 %693
    %695 = vrot.lane.b32.xlu0 %v690, 126
    %v696 = vpop.permute.xlu0 %695
    %699 = vrot.lane.b32.xlu0 %v689, 30
    %v700 = vpop.permute.xlu0 %699
    %701 = vrot.lane.b32.xlu0 %v690, 30
    %v702 = vpop.permute.xlu0 %701
    %v705 = vsel %vm221, %v694, %v700
    %v706 = vsel %vm221, %v696, %v702
    %707 = vrot.lane.b32.xlu0 %v689, 98
    %v708 = vpop.permute.xlu0 %707
    %709 = vrot.lane.b32.xlu0 %v690, 98
    %v710 = vpop.permute.xlu0 %709
    %713 = vrot.lane.b32.xlu0 %v689, 2
    %v714 = vpop.permute.xlu0 %713
    %715 = vrot.lane.b32.xlu0 %v690, 2
    %v716 = vpop.permute.xlu0 %715
    %v719 = vsel %vm236, %v708, %v714
    %v720 = vsel %vm236, %v710, %v716
    %v721 = vsel %vm175, %v705, %v719
    %v722 = vsel %vm175, %v706, %v720
    %v723 = vadd.f32 %v689, %v721
    %v724 = vadd.f32 %v690, %v722
    %727 = vrot.lane.b32.xlu0 %v723, 127
    %v728 = vpop.permute.xlu0 %727
    %729 = vrot.lane.b32.xlu0 %v724, 127
    %v730 = vpop.permute.xlu0 %729
    %733 = vrot.lane.b32.xlu0 %v723, 31
    %v734 = vpop.permute.xlu0 %733
    %735 = vrot.lane.b32.xlu0 %v724, 31
    %v736 = vpop.permute.xlu0 %735
    %v739 = vsel %vm257, %v728, %v734
    %v740 = vsel %vm257, %v730, %v736
    %741 = vrot.lane.b32.xlu0 %v723, 97
    %v742 = vpop.permute.xlu0 %741
    %743 = vrot.lane.b32.xlu0 %v724, 97
    %v744 = vpop.permute.xlu0 %743
    %747 = vrot.lane.b32.xlu0 %v723, 1
    %v748 = vpop.permute.xlu0 %747
    %749 = vrot.lane.b32.xlu0 %v724, 1
    %v750 = vpop.permute.xlu0 %749
    %v753 = vsel %vm272, %v742, %v748
    %v754 = vsel %vm272, %v744, %v750
    %v755 = vsel %vm188, %v739, %v753
    %v756 = vsel %vm188, %v740, %v754
    %v757 = vadd.f32 %v723, %v755
    %v758 = vadd.f32 %v724, %v756
    %v759 = vsel %vm65, %v757, -inf
    %760 = vmax.xlane.f32.xlu0 %v759
    %v761 = vpop.xlane.xlu0 %760
    %v762 = vsel %vm65, %v758, -inf
    %763 = vmax.xlane.f32.xlu0 %v762
    %v764 = vpop.xlane.xlu0 %763
    %v765 = vsub.f32 %v757, %v761
    %v766 = vsub.f32 %v758, %v764
    %v767 = vmul.f32 %v765, 1.442695
    %v768 = vpow.pop %v767
    %v769 = vmul.f32 %v766, 1.442695
    %v770 = vpow.pop %v769
    %v771 = vsel %vm65, %v768, 0.0
    %772 = vadd.xlane.f32.xlu0 %v771
    %v773 = vpop.xlane.xlu0 %772
    %v774 = vsel %vm65, %v770, 0.0
    %775 = vadd.xlane.f32.xlu0 %v774
    %v776 = vpop.xlane.xlu0 %775
    %v777 = vmul.f32 %v773, 0.25
    %v778 = vmul.f32 %v776, 0.25
    %v779 = vrcp.pop %v777
    %v780 = vmul.f32 %v768, %v779
    %v781 = vrcp.pop %v778
    %v782 = vmul.f32 %v770, %v781
    %783 = vrot.lane.b32.xlu0 %v676, 64
    %v784 = vpop.permute.xlu0 %783
    %785 = vrot.lane.b32.xlu0 %v680, 64
    %v786 = vpop.permute.xlu0 %785
    %v789 = vmul.f32 %v780, %v784
    %v790 = vmul.f32 %v782, %v786
    %v791 = vadd.f32 %v671, %v789
    %v792 = vadd.f32 %v672, %v790
    %v793 = vlaneseq
    %v794 = vshrl.u32 %v793, 7
    %v795 = vsub.s32 5, %v794
    %v796 = vrot.slane %v139, %v795
    %v797 = vlaneseq
    %v798 = vshrl.u32 %v797, 7
    %v799 = vsub.s32 5, %v798
    %v800 = vrot.slane %v144, %v799
    %803 = vrot.lane.b32.xlu0 %v796, 96
    %v804 = vpop.permute.xlu0 %803
    %805 = vrot.lane.b32.xlu0 %v800, 96
    %v806 = vpop.permute.xlu0 %805
    %v809 = vmul.f32 %v147, %v804
    %v810 = vmul.f32 %v148, %v806
    %813 = vrot.lane.b32.xlu0 %v809, 126
    %v814 = vpop.permute.xlu0 %813
    %815 = vrot.lane.b32.xlu0 %v810, 126
    %v816 = vpop.permute.xlu0 %815
    %819 = vrot.lane.b32.xlu0 %v809, 30
    %v820 = vpop.permute.xlu0 %819
    %821 = vrot.lane.b32.xlu0 %v810, 30
    %v822 = vpop.permute.xlu0 %821
    %v825 = vsel %vm221, %v814, %v820
    %v826 = vsel %vm221, %v816, %v822
    %827 = vrot.lane.b32.xlu0 %v809, 98
    %v828 = vpop.permute.xlu0 %827
    %829 = vrot.lane.b32.xlu0 %v810, 98
    %v830 = vpop.permute.xlu0 %829
    %833 = vrot.lane.b32.xlu0 %v809, 2
    %v834 = vpop.permute.xlu0 %833
    %835 = vrot.lane.b32.xlu0 %v810, 2
    %v836 = vpop.permute.xlu0 %835
    %v839 = vsel %vm236, %v828, %v834
    %v840 = vsel %vm236, %v830, %v836
    %v841 = vsel %vm175, %v825, %v839
    %v842 = vsel %vm175, %v826, %v840
    %v843 = vadd.f32 %v809, %v841
    %v844 = vadd.f32 %v810, %v842
    %847 = vrot.lane.b32.xlu0 %v843, 127
    %v848 = vpop.permute.xlu0 %847
    %849 = vrot.lane.b32.xlu0 %v844, 127
    %v850 = vpop.permute.xlu0 %849
    %853 = vrot.lane.b32.xlu0 %v843, 31
    %v854 = vpop.permute.xlu0 %853
    %855 = vrot.lane.b32.xlu0 %v844, 31
    %v856 = vpop.permute.xlu0 %855
    %v859 = vsel %vm257, %v848, %v854
    %v860 = vsel %vm257, %v850, %v856
    %861 = vrot.lane.b32.xlu0 %v843, 97
    %v862 = vpop.permute.xlu0 %861
    %863 = vrot.lane.b32.xlu0 %v844, 97
    %v864 = vpop.permute.xlu0 %863
    %867 = vrot.lane.b32.xlu0 %v843, 1
    %v868 = vpop.permute.xlu0 %867
    %869 = vrot.lane.b32.xlu0 %v844, 1
    %v870 = vpop.permute.xlu0 %869
    %v873 = vsel %vm272, %v862, %v868
    %v874 = vsel %vm272, %v864, %v870
    %v875 = vsel %vm188, %v859, %v873
    %v876 = vsel %vm188, %v860, %v874
    %v877 = vadd.f32 %v843, %v875
    %v878 = vadd.f32 %v844, %v876
    %v879 = vsel %vm65, %v877, -inf
    %880 = vmax.xlane.f32.xlu0 %v879
    %v881 = vpop.xlane.xlu0 %880
    %v882 = vsel %vm65, %v878, -inf
    %883 = vmax.xlane.f32.xlu0 %v882
    %v884 = vpop.xlane.xlu0 %883
    %v885 = vsub.f32 %v877, %v881
    %v886 = vsub.f32 %v878, %v884
    %v887 = vmul.f32 %v885, 1.442695
    %v888 = vpow.pop %v887
    %v889 = vmul.f32 %v886, 1.442695
    %v890 = vpow.pop %v889
    %v891 = vsel %vm65, %v888, 0.0
    %892 = vadd.xlane.f32.xlu0 %v891
    %v893 = vpop.xlane.xlu0 %892
    %v894 = vsel %vm65, %v890, 0.0
    %895 = vadd.xlane.f32.xlu0 %v894
    %v896 = vpop.xlane.xlu0 %895
    %v897 = vmul.f32 %v893, 0.25
    %v898 = vmul.f32 %v896, 0.25
    %v899 = vrcp.pop %v897
    %v900 = vmul.f32 %v888, %v899
    %v901 = vrcp.pop %v898
    %v902 = vmul.f32 %v890, %v901
    %903 = vrot.lane.b32.xlu0 %v796, 64
    %v904 = vpop.permute.xlu0 %903
    %905 = vrot.lane.b32.xlu0 %v800, 64
    %v906 = vpop.permute.xlu0 %905
    %v909 = vmul.f32 %v900, %v904
    %v910 = vmul.f32 %v902, %v906
    %v911 = vadd.f32 %v791, %v909
    %v912 = vadd.f32 %v792, %v910
    %v913 = vlaneseq
    %v914 = vshrl.u32 %v913, 7
    %v915 = vsub.s32 6, %v914
    %v916 = vrot.slane %v139, %v915
    %v917 = vlaneseq
    %v918 = vshrl.u32 %v917, 7
    %v919 = vsub.s32 6, %v918
    %v920 = vrot.slane %v144, %v919
    %923 = vrot.lane.b32.xlu0 %v916, 96
    %v924 = vpop.permute.xlu0 %923
    %925 = vrot.lane.b32.xlu0 %v920, 96
    %v926 = vpop.permute.xlu0 %925
    %v929 = vmul.f32 %v147, %v924
    %v930 = vmul.f32 %v148, %v926
    %933 = vrot.lane.b32.xlu0 %v929, 126
    %v934 = vpop.permute.xlu0 %933
    %935 = vrot.lane.b32.xlu0 %v930, 126
    %v936 = vpop.permute.xlu0 %935
    %939 = vrot.lane.b32.xlu0 %v929, 30
    %v940 = vpop.permute.xlu0 %939
    %941 = vrot.lane.b32.xlu0 %v930, 30
    %v942 = vpop.permute.xlu0 %941
    %v945 = vsel %vm221, %v934, %v940
    %v946 = vsel %vm221, %v936, %v942
    %947 = vrot.lane.b32.xlu0 %v929, 98
    %v948 = vpop.permute.xlu0 %947
    %949 = vrot.lane.b32.xlu0 %v930, 98
    %v950 = vpop.permute.xlu0 %949
    %953 = vrot.lane.b32.xlu0 %v929, 2
    %v954 = vpop.permute.xlu0 %953
    %955 = vrot.lane.b32.xlu0 %v930, 2
    %v956 = vpop.permute.xlu0 %955
    %v959 = vsel %vm236, %v948, %v954
    %v960 = vsel %vm236, %v950, %v956
    %v961 = vsel %vm175, %v945, %v959
    %v962 = vsel %vm175, %v946, %v960
    %v963 = vadd.f32 %v929, %v961
    %v964 = vadd.f32 %v930, %v962
    %967 = vrot.lane.b32.xlu0 %v963, 127
    %v968 = vpop.permute.xlu0 %967
    %969 = vrot.lane.b32.xlu0 %v964, 127
    %v970 = vpop.permute.xlu0 %969
    %973 = vrot.lane.b32.xlu0 %v963, 31
    %v974 = vpop.permute.xlu0 %973
    %975 = vrot.lane.b32.xlu0 %v964, 31
    %v976 = vpop.permute.xlu0 %975
    %v979 = vsel %vm257, %v968, %v974
    %v980 = vsel %vm257, %v970, %v976
    %981 = vrot.lane.b32.xlu0 %v963, 97
    %v982 = vpop.permute.xlu0 %981
    %983 = vrot.lane.b32.xlu0 %v964, 97
    %v984 = vpop.permute.xlu0 %983
    %987 = vrot.lane.b32.xlu0 %v963, 1
    %v988 = vpop.permute.xlu0 %987
    %989 = vrot.lane.b32.xlu0 %v964, 1
    %v990 = vpop.permute.xlu0 %989
    %v993 = vsel %vm272, %v982, %v988
    %v994 = vsel %vm272, %v984, %v990
    %v995 = vsel %vm188, %v979, %v993
    %v996 = vsel %vm188, %v980, %v994
    %v997 = vadd.f32 %v963, %v995
    %v998 = vadd.f32 %v964, %v996
    %v999 = vsel %vm65, %v997, -inf
    %1000 = vmax.xlane.f32.xlu0 %v999
    %v1001 = vpop.xlane.xlu0 %1000
    %v1002 = vsel %vm65, %v998, -inf
    %1003 = vmax.xlane.f32.xlu0 %v1002
    %v1004 = vpop.xlane.xlu0 %1003
    %v1005 = vsub.f32 %v997, %v1001
    %v1006 = vsub.f32 %v998, %v1004
    %v1007 = vmul.f32 %v1005, 1.442695
    %v1008 = vpow.pop %v1007
    %v1009 = vmul.f32 %v1006, 1.442695
    %v1010 = vpow.pop %v1009
    %v1011 = vsel %vm65, %v1008, 0.0
    %1012 = vadd.xlane.f32.xlu0 %v1011
    %v1013 = vpop.xlane.xlu0 %1012
    %v1014 = vsel %vm65, %v1010, 0.0
    %1015 = vadd.xlane.f32.xlu0 %v1014
    %v1016 = vpop.xlane.xlu0 %1015
    %v1017 = vmul.f32 %v1013, 0.25
    %v1018 = vmul.f32 %v1016, 0.25
    %v1019 = vrcp.pop %v1017
    %v1020 = vmul.f32 %v1008, %v1019
    %v1021 = vrcp.pop %v1018
    %v1022 = vmul.f32 %v1010, %v1021
    %1023 = vrot.lane.b32.xlu0 %v916, 64
    %v1024 = vpop.permute.xlu0 %1023
    %1025 = vrot.lane.b32.xlu0 %v920, 64
    %v1026 = vpop.permute.xlu0 %1025
    %v1029 = vmul.f32 %v1020, %v1024
    %v1030 = vmul.f32 %v1022, %v1026
    %v1031 = vadd.f32 %v911, %v1029
    %v1032 = vadd.f32 %v912, %v1030
    %v1033 = vlaneseq
    %v1034 = vshrl.u32 %v1033, 7
    %v1035 = vsub.s32 7, %v1034
    %v1036 = vrot.slane %v139, %v1035
    %v1037 = vlaneseq
    %v1038 = vshrl.u32 %v1037, 7
    %v1039 = vsub.s32 7, %v1038
    %v1040 = vrot.slane %v144, %v1039
    %1043 = vrot.lane.b32.xlu0 %v1036, 96
    %v1044 = vpop.permute.xlu0 %1043
    %1045 = vrot.lane.b32.xlu0 %v1040, 96
    %v1046 = vpop.permute.xlu0 %1045
    %v1049 = vmul.f32 %v147, %v1044
    %v1050 = vmul.f32 %v148, %v1046
    %1053 = vrot.lane.b32.xlu0 %v1049, 126
    %v1054 = vpop.permute.xlu0 %1053
    %1055 = vrot.lane.b32.xlu0 %v1050, 126
    %v1056 = vpop.permute.xlu0 %1055
    %1059 = vrot.lane.b32.xlu0 %v1049, 30
    %v1060 = vpop.permute.xlu0 %1059
    %1061 = vrot.lane.b32.xlu0 %v1050, 30
    %v1062 = vpop.permute.xlu0 %1061
    %v1065 = vsel %vm221, %v1054, %v1060
    %v1066 = vsel %vm221, %v1056, %v1062
    %1067 = vrot.lane.b32.xlu0 %v1049, 98
    %v1068 = vpop.permute.xlu0 %1067
    %1069 = vrot.lane.b32.xlu0 %v1050, 98
    %v1070 = vpop.permute.xlu0 %1069
    %1073 = vrot.lane.b32.xlu0 %v1049, 2
    %v1074 = vpop.permute.xlu0 %1073
    %1075 = vrot.lane.b32.xlu0 %v1050, 2
    %v1076 = vpop.permute.xlu0 %1075
    %v1079 = vsel %vm236, %v1068, %v1074
    %v1080 = vsel %vm236, %v1070, %v1076
    %v1081 = vsel %vm175, %v1065, %v1079
    %v1082 = vsel %vm175, %v1066, %v1080
    %v1083 = vadd.f32 %v1049, %v1081
    %v1084 = vadd.f32 %v1050, %v1082
    %1087 = vrot.lane.b32.xlu0 %v1083, 127
    %v1088 = vpop.permute.xlu0 %1087
    %1089 = vrot.lane.b32.xlu0 %v1084, 127
    %v1090 = vpop.permute.xlu0 %1089
    %1093 = vrot.lane.b32.xlu0 %v1083, 31
    %v1094 = vpop.permute.xlu0 %1093
    %1095 = vrot.lane.b32.xlu0 %v1084, 31
    %v1096 = vpop.permute.xlu0 %1095
    %v1099 = vsel %vm257, %v1088, %v1094
    %v1100 = vsel %vm257, %v1090, %v1096
    %1101 = vrot.lane.b32.xlu0 %v1083, 97
    %v1102 = vpop.permute.xlu0 %1101
    %1103 = vrot.lane.b32.xlu0 %v1084, 97
    %v1104 = vpop.permute.xlu0 %1103
    %1107 = vrot.lane.b32.xlu0 %v1083, 1
    %v1108 = vpop.permute.xlu0 %1107
    %1109 = vrot.lane.b32.xlu0 %v1084, 1
    %v1110 = vpop.permute.xlu0 %1109
    %v1113 = vsel %vm272, %v1102, %v1108
    %v1114 = vsel %vm272, %v1104, %v1110
    %v1115 = vsel %vm188, %v1099, %v1113
    %v1116 = vsel %vm188, %v1100, %v1114
    %v1117 = vadd.f32 %v1083, %v1115
    %v1118 = vadd.f32 %v1084, %v1116
    %v1119 = vsel %vm65, %v1117, -inf
    %1120 = vmax.xlane.f32.xlu0 %v1119
    %v1121 = vpop.xlane.xlu0 %1120
    %v1122 = vsel %vm65, %v1118, -inf
    %1123 = vmax.xlane.f32.xlu0 %v1122
    %v1124 = vpop.xlane.xlu0 %1123
    %v1125 = vsub.f32 %v1117, %v1121
    %v1126 = vsub.f32 %v1118, %v1124
    %v1127 = vmul.f32 %v1125, 1.442695
    %v1128 = vpow.pop %v1127
    %v1129 = vmul.f32 %v1126, 1.442695
    %v1130 = vpow.pop %v1129
    %v1131 = vsel %vm65, %v1128, 0.0
    %1132 = vadd.xlane.f32.xlu0 %v1131
    %v1133 = vpop.xlane.xlu0 %1132
    %v1134 = vsel %vm65, %v1130, 0.0
    %1135 = vadd.xlane.f32.xlu0 %v1134
    %v1136 = vpop.xlane.xlu0 %1135
    %v1137 = vmul.f32 %v1133, 0.25
    %v1138 = vmul.f32 %v1136, 0.25
    %v1139 = vrcp.pop %v1137
    %v1140 = vmul.f32 %v1128, %v1139
    %v1141 = vrcp.pop %v1138
    %v1142 = vmul.f32 %v1130, %v1141
    %1143 = vrot.lane.b32.xlu0 %v1036, 64
    %v1144 = vpop.permute.xlu0 %1143
    %1145 = vrot.lane.b32.xlu0 %v1040, 64
    %v1146 = vpop.permute.xlu0 %1145
    %v1149 = vmul.f32 %v1140, %v1144
    %v1150 = vmul.f32 %v1142, %v1146
    %v1151 = vadd.f32 %v1031, %v1149
    %v1152 = vadd.f32 %v1032, %v1150
    %v1153 = vld [vmem:[#allocation7] sm:$0xff]
    %v1154 = vld [vmem:[#allocation7 + $0x8] sm:$0xff]
    %v1155 = vld [vmem:[#allocation7 + $0x10] sm:$0xff]
    %v1156 = vld [vmem:[#allocation7 + $0x18] sm:$0xff]
    %v1157 = vld [vmem:[%s3] sm:$0x1]
    %v1159 = vlaneseq
    %v1160 = vshrl.u32 %v1159, 7
    %v1161 = vsub.s32 0, %v1160
    %v1162 = vrot.slane %v1157, %v1161
    %v1165 = vsel %vm65, %v1151, 0
    %v1168 = vsel %vm65, %v1152, 0
    %1170 = vmatprep.subr.mxu0 0.0
    %1171 = vmatpush1.msra.mxu0 %v1153
    %1172 = vmatprep.subr.mxu0 0.0
    %1173 = vmatpush1.msra.mxu0 %v1154
    %1174 = vmatprep.subr.mxu0 0.0
    %1175 = vmatpush1.msra.mxu0 %v1155
    %1176 = vmatprep.subr.mxu0 0.0
    %1177 = vmatpush1.msra.mxu0 %v1156
    %1178 = vmatprep.subr.mxu0 0.0
    %1179 = vmatpush1.msra.mxu0 0.0
    %1180 = vmatprep.subr.mxu0 0.0
    %1181 = vmatpush1.msra.mxu0 0.0
    %1182 = vmatprep.subr.mxu0 0.0
    %1183 = vmatpush1.msra.mxu0 0.0
    %1184 = vmatprep.subr.mxu0 0.0
    %1185 = vmatpush1.msra.mxu0 0.0
    %1186 = vmatprep.subr.mxu0 0.0
    %1187 = vmatpush1.msra.mxu0 0.0
    %1188 = vmatprep.subr.mxu0 0.0
    %1189 = vmatpush1.msra.mxu0 0.0
    %1190 = vmatprep.subr.mxu0 0.0
    %1191 = vmatpush1.msra.mxu0 0.0
    %1192 = vmatprep.subr.mxu0 0.0
    %1193 = vmatpush1.msra.mxu0 0.0
    %1194 = vmatprep.subr.mxu0 0.0
    %1195 = vmatpush1.msra.mxu0 0.0
    %1196 = vmatprep.subr.mxu0 0.0
    %1197 = vmatpush1.msra.mxu0 0.0
    %1198 = vmatprep.subr.mxu0 0.0
    %1199 = vmatpush1.msra.mxu0 0.0
    %1200 = vmatprep.subr.mxu0 0.0
    %1201 = vmatpush1.msra.mxu0 0.0
    %1202 = vmatprep.subr.mxu0 0.0
    %1203 = vmatpush1.msra.mxu0 0.0
    %1204 = vmatprep.subr.mxu0 0.0
    %1205 = vmatpush1.msra.mxu0 0.0
    %1206 = vmatprep.subr.mxu0 0.0
    %1207 = vmatpush1.msra.mxu0 0.0
    %1208 = vmatprep.subr.mxu0 0.0
    %1209 = vmatpush1.msra.mxu0 0.0
    %1210 = vmatprep.subr.mxu0 0.0
    %1211 = vmatpush1.msra.mxu0 0.0
    %1212 = vmatprep.subr.mxu0 0.0
    %1213 = vmatpush1.msra.mxu0 0.0
    %1214 = vmatprep.subr.mxu0 0.0
    %1215 = vmatpush1.msra.mxu0 0.0
    %1216 = vmatprep.subr.mxu0 0.0
    %1217 = vmatpush1.msra.mxu0 0.0
    %1218 = vmatprep.subr.mxu0 0.0
    %1219 = vmatpush1.msra.mxu0 0.0
    %1220 = vmatprep.subr.mxu0 0.0
    %1221 = vmatpush1.msra.mxu0 0.0
    %1222 = vmatprep.subr.mxu0 0.0
    %1223 = vmatpush1.msra.mxu0 0.0
    %1224 = vmatprep.subr.mxu0 0.0
    %1225 = vmatpush1.msra.mxu0 0.0
    %1226 = vmatprep.subr.mxu0 0.0
    %1227 = vmatpush1.msra.mxu0 0.0
    %1228 = vmatprep.subr.mxu0 0.0
    %1229 = vmatpush1.msra.mxu0 0.0
    %1230 = vmatprep.subr.mxu0 0.0
    %1231 = vmatpush1.msra.mxu0 0.0
    %1232 = vmatprep.subr.mxu0 0.0
    %1233 = vmatpush1.msra.mxu0 0.0
    %1234 = vmatprep.mubr.f32.mxu0 0.0
    %1235 = vmatmul.mubr.f32.gmra.mrb[0].mxu0 %v1165
    %v1236 = vpop.f32.mrb[0].mxu0
    %v1237 = vadd.f32 %v1162, %v1236
    %v1238 = vpop.f32.mrb[0].mxu0
    %1239 = vmatprep.mubr.f32.mxu0 0.0
    %1240 = vmatmul.mubr.f32.gmra.mrb[0].mxu0 %v1168
    %v1241 = vpop.f32.mrb[0].mxu0
    %v1242 = vadd.f32 %v1162, %v1241
    %v1243 = vpop.f32.mrb[0].mxu0
    %1244 = vdwg.mxu0
    %1245 = vst.msk [vmem:[#allocation8] sm:$0xff] %vm65, %v1237
    %1246 = vst.msk [vmem:[#allocation8 + $0x8] sm:$0xff] %vm65, %v1242
    // Predicated region
    $region30: #{tpu_custom_call.1} parent=1 // pred_check
      _
    $region31: #{tpu_custom_call.1} parent=1 // pred_check_branch
      %1248 = sbr.rel (0) target = $region33
    $region32: #{tpu_custom_call.1} parent=1 // pred_region
      %s1250 = ssub.s32 256, 256
      %1251 = vsyncadd [#allocation4], %s1250
      %s1252 = sshll.u32 [#allocation8], 4
      %s1253 = int_to_ptr.vmem [resolvable:$true] %s1252
      %1258 = dma.vmem_to_hbm [thread:$0]  %s1253, 256, %s4, [#allocation4], 128, 128, 8
    $region33: #{tpu_custom_call.1} parent=1 // pred_fallthru
      _
    // Predicated region
    $region34: #{tpu_custom_call.1} parent=1 // pred_check
      _
    $region35: #{tpu_custom_call.1} parent=1 // pred_check_branch
      %1260 = sbr.rel (0) target = $region37
    $region36: #{tpu_custom_call.1} parent=1 // pred_region
      %1261 = dma.done [#allocation4], 256
    $region37: #{tpu_custom_call.1} parent=1 // pred_fallthru
      _
    %1262 = vsyncpa [#allocation3], 1
    %1263 = vsyncpa [#allocation6], 1
    %1264 = vsyncpa [#allocation4], 1

</llo_original>
